<compile_context>
chip_gen: v7x
topology: tpu7x:2x2x1
jax: 0.10.0
libtpu: 0.0.40
codegen_flags: <defaults>
</compile_context>

<pallas_src>
import functools

import jax
import jax.numpy as jnp
from jax.experimental import pallas as pl
from jax.experimental.pallas import tpu as pltpu


def _vae_kernel(meta, n_enc, n_dec, latent,
                x_ref, eps_ref, w_ref, b_ref,
                xr_ref, mu_ref, lv_ref):
    """Fused VAE forward over one (TB, D) batch tile.

    meta: static tuple of (col_off, d_in, d_out) describing where each layer
    lives inside the packed weight/bias slabs, ordered
    [enc_0..enc_{n-1}, mu||logvar (fused), fc1, dec_0..dec_{m-1}].
    """

    def linear(h, m):
        off, d_in, d_out = m
        w = w_ref[0:d_in, off:off + d_out]      # bf16, static (aligned) slice
        b = b_ref[:, off:off + d_out]           # (1, d_out) f32 row
        out = jnp.dot(h.astype(jnp.bfloat16), w,
                      preferred_element_type=jnp.float32)  # MXU, f32 accum
        return out + b                          # f32 epilogue

    k = 0
    h = x_ref[...]
    for _ in range(n_enc):                      # encoder: relu(dropout(Wx+b)), p=0
        h = jnp.maximum(linear(h, meta[k]), 0.0)
        k += 1

    mulv = linear(h, meta[k]); k += 1           # fused mu || logvar (one MXU pass)
    mu = mulv[:, :latent]                       # latent is a multiple of 128 ->
    lv = mulv[:, latent:]                       # lane-aligned free split

    # reparameterize: z = mu + eps * exp(logvar / 2)   (f32 VPU/EUP)
    z = mu + eps_ref[...] * jnp.exp(lv * 0.5)

    h = linear(z, meta[k]); k += 1              # fc1 (no activation)

    for i in range(n_dec):                      # decoder MLP
        h = linear(h, meta[k]); k += 1
        if i < n_dec - 1:
            h = jnp.maximum(h, 0.0)

    xr_ref[...] = h
    mu_ref[...] = mu
    lv_ref[...] = lv


def _pack_params(params):
    """Fuse mu/logvar and pack every Linear into one bf16 weight slab plus one
    f32 bias row. Weight layout: rows [0:d_in] (zero-padded to max fan-in),
    columns concatenated; with the default dims all column offsets land on
    128-lane boundaries so in-kernel static slices are free."""
    w_mulv = jnp.concatenate([params["w_mu"], params["w_lv"]], axis=1)
    b_mulv = jnp.concatenate([params["b_mu"], params["b_lv"]], axis=1)
    ws = list(params["enc_ws"]) + [w_mulv, params["w_fc1"]] + list(params["dec_ws"])
    bs = list(params["enc_bs"]) + [b_mulv, params["b_fc1"]] + list(params["dec_bs"])

    max_in = max(int(w.shape[0]) for w in ws)
    meta, cols, off = [], [], 0
    for w in ws:
        d_in, d_out = int(w.shape[0]), int(w.shape[1])
        meta.append((off, d_in, d_out))
        cols.append(jnp.pad(w.astype(jnp.bfloat16), ((0, max_in - d_in), (0, 0))))
        off += d_out
    w_slab = jnp.concatenate(cols, axis=1)                       # (max_in, tot) bf16
    b_slab = jnp.concatenate([b.astype(jnp.float32) for b in bs], axis=1)  # (1, tot)
    return w_slab, b_slab, tuple(meta)


def vae_forward(x, eps, params):
    """Batch-gridded single pallas_call; weights stay VMEM-resident across steps."""
    n_enc = len(params["enc_ws"])
    n_dec = len(params["dec_ws"])
    L = int(params["w_mu"].shape[1])
    B, D0 = x.shape
    D_out = int(params["dec_ws"][-1].shape[1])

    w_slab, b_slab, meta = _pack_params(params)
    max_in, total_out = w_slab.shape

    # >=128 rows per MXU push when the batch allows it (fills the systolic
    # array); otherwise process the whole batch in one step.
    if B >= 128 and B % 128 == 0:
        TB = 128
    else:
        TB = B
    grid = (B // TB,)

    kernel = functools.partial(_vae_kernel, meta, n_enc, n_dec, L)

    return pl.pallas_call(
        kernel,
        out_shape=(
            jax.ShapeDtypeStruct((B, D_out), jnp.float32),   # x_reconst
            jax.ShapeDtypeStruct((B, L), jnp.float32),       # mu
            jax.ShapeDtypeStruct((B, L), jnp.float32),       # log_var
        ),
        grid_spec=pltpu.PrefetchScalarGridSpec(
            num_scalar_prefetch=0,
            grid=grid,
            in_specs=[
                pl.BlockSpec((TB, D0), lambda i: (i, 0)),            # x tile
                pl.BlockSpec((TB, L), lambda i: (i, 0)),             # eps tile
                pl.BlockSpec((max_in, total_out), lambda i: (0, 0)),  # weights (resident)
                pl.BlockSpec((1, total_out), lambda i: (0, 0)),       # biases (resident)
            ],
            out_specs=[
                pl.BlockSpec((TB, D_out), lambda i: (i, 0)),
                pl.BlockSpec((TB, L), lambda i: (i, 0)),
                pl.BlockSpec((TB, L), lambda i: (i, 0)),
            ],
        ),
        compiler_params=pltpu.CompilerParams(
            dimension_semantics=("parallel",)),   # shards across v7x's 2 TCs
    )(x, eps, w_slab, b_slab)


def _ref_forward(x, eps, params):
    """Plain-JAX reference with the same bf16-in / f32-accumulate math."""
    def lin(h, w, b):
        return jnp.dot(h.astype(jnp.bfloat16), w.astype(jnp.bfloat16),
                       preferred_element_type=jnp.float32) + b

    h = x
    for w, b in zip(params["enc_ws"], params["enc_bs"]):
        h = jnp.maximum(lin(h, w, b), 0.0)
    mu = lin(h, params["w_mu"], params["b_mu"])
    lv = lin(h, params["w_lv"], params["b_lv"])
    z = mu + eps * jnp.exp(lv / 2.0)
    h = lin(z, params["w_fc1"], params["b_fc1"])
    n_dec = len(params["dec_ws"])
    for i, (w, b) in enumerate(zip(params["dec_ws"], params["dec_bs"])):
        h = lin(h, w, b)
        if i < n_dec - 1:
            h = jnp.maximum(h, 0.0)
    return h, mu, lv


def _linear_params(key, fan_in, fan_out):
    kw, kb = jax.random.split(key)
    w = jax.random.normal(kw, (fan_in, fan_out), jnp.float32) * 0.05
    b = jax.random.normal(kb, (1, fan_out), jnp.float32) * 0.01
    return w, b


if __name__ == "__main__":
    # VAE(encode_dims=[256, 128, 128], decode_dims=[128, 128, 256], dropout=0.0)
    encode_dims = [256, 128, 128]
    decode_dims = [128, 128, 256]
    B = 256   # two 128-row batch tiles -> exercises the grid / both v7x TCs

    key = jax.random.PRNGKey(0)
    keys = jax.random.split(key, 16)

    enc_ws, enc_bs = [], []
    kidx = 0
    for i in range(len(encode_dims) - 2):
        w, b = _linear_params(keys[kidx], encode_dims[i], encode_dims[i + 1])
        enc_ws.append(w); enc_bs.append(b); kidx += 1
    w_mu, b_mu = _linear_params(keys[kidx], encode_dims[-2], encode_dims[-1]); kidx += 1
    w_lv, b_lv = _linear_params(keys[kidx], encode_dims[-2], encode_dims[-1]); kidx += 1
    w_fc1, b_fc1 = _linear_params(keys[kidx], encode_dims[-1], encode_dims[-1]); kidx += 1
    dec_ws, dec_bs = [], []
    for i in range(len(decode_dims) - 1):
        w, b = _linear_params(keys[kidx], decode_dims[i], decode_dims[i + 1])
        dec_ws.append(w); dec_bs.append(b); kidx += 1

    params = dict(enc_ws=enc_ws, enc_bs=enc_bs,
                  w_mu=w_mu, b_mu=b_mu, w_lv=w_lv, b_lv=b_lv,
                  w_fc1=w_fc1, b_fc1=b_fc1,
                  dec_ws=dec_ws, dec_bs=dec_bs)

    x = jax.random.normal(keys[kidx], (B, encode_dims[0]), jnp.float32); kidx += 1
    eps = jax.random.normal(keys[kidx], (B, encode_dims[-1]), jnp.float32)

    x_reconst, mu, log_var = jax.block_until_ready(vae_forward(x, eps, params))

    xr_ref, mu_ref, lv_ref = _ref_forward(x, eps, params)
    assert jnp.allclose(x_reconst, xr_ref, rtol=1e-2, atol=1e-2)
    assert jnp.allclose(mu, mu_ref, rtol=1e-2, atol=1e-2)
    assert jnp.allclose(log_var, lv_ref, rtol=1e-2, atol=1e-2)

    print("KERNEL_OK")
</pallas_src>

<mosaic_0001>
module attributes {stable_mosaic.version = 11 : i64} {
  func.func @_vae_kernel(%arg0: i32, %arg1: memref<128x256xf32, #tpu.memory_space<vmem>>, %arg2: memref<128x128xf32, #tpu.memory_space<vmem>>, %arg3: memref<256x896xbf16, #tpu.memory_space<vmem>>, %arg4: memref<1x896xf32, #tpu.memory_space<vmem>>, %arg5: memref<128x256xf32, #tpu.memory_space<vmem>>, %arg6: memref<128x128xf32, #tpu.memory_space<vmem>>, %arg7: memref<128x128xf32, #tpu.memory_space<vmem>>) attributes {dimension_semantics = [#tpu.dimension_semantics<parallel>], iteration_bounds = array<i64: 2>, scalar_prefetch = 0 : i64, scratch_operands = 0 : i64, tpu.core_type = #tpu.core_type<tc>, window_params = [{transform_indices = @transform_0, window_bounds = array<i64: 128, 256>}, {transform_indices = @transform_1, window_bounds = array<i64: 128, 128>}, {pipeline_mode = #tpu.pipeline_mode<synchronous>, transform_indices = @transform_2, window_bounds = array<i64: 256, 896>}, {pipeline_mode = #tpu.pipeline_mode<synchronous>, transform_indices = @transform_3, window_bounds = array<i64: 1, 896>}, {transform_indices = @transform_4, window_bounds = array<i64: 128, 256>}, {transform_indices = @transform_5, window_bounds = array<i64: 128, 128>}, {transform_indices = @transform_6, window_bounds = array<i64: 128, 128>}]} {
    %c0 = arith.constant 0 : index
    %c0_0 = arith.constant 0 : index
    %0 = vector.load %arg1[%c0, %c0_0] : memref<128x256xf32, #tpu.memory_space<vmem>>, vector<128x256xf32>
    %c0_1 = arith.constant 0 : index
    %c0_2 = arith.constant 0 : index
    %1 = vector.load %arg3[%c0_1, %c0_2] : memref<256x896xbf16, #tpu.memory_space<vmem>>, vector<256x128xbf16>
    %c0_3 = arith.constant 0 : index
    %c0_4 = arith.constant 0 : index
    %2 = vector.load %arg4[%c0_3, %c0_4] : memref<1x896xf32, #tpu.memory_space<vmem>>, vector<1x128xf32>
    %3 = arith.truncf %0 : vector<128x256xf32> to vector<128x256xbf16>
    %cst = arith.constant dense<0.000000e+00> : vector<128x128xf32>
    %4 = tpu.matmul %3, %1, %cst {dimension_numbers = #tpu.dot_dimension_numbers<[1], [0], [0], [1], [0, 0, 1, 1], [], []>} : vector<128x256xbf16>, vector<256x128xbf16>, vector<128x128xf32> -> vector<128x128xf32>
    %5 = vector.broadcast %2 : vector<1x128xf32> to vector<128x128xf32>
    %6 = arith.addf %4, %5 : vector<128x128xf32>
    %cst_5 = arith.constant 0.000000e+00 : f32
    %7 = vector.broadcast %cst_5 : f32 to vector<128x128xf32>
    %8 = arith.maximumf %6, %7 : vector<128x128xf32>
    %c0_6 = arith.constant 0 : index
    %c128 = arith.constant 128 : index
    %9 = vector.load %arg3[%c0_6, %c128] : memref<256x896xbf16, #tpu.memory_space<vmem>>, vector<128x256xbf16>
    %c0_7 = arith.constant 0 : index
    %c128_8 = arith.constant 128 : index
    %10 = vector.load %arg4[%c0_7, %c128_8] : memref<1x896xf32, #tpu.memory_space<vmem>>, vector<1x256xf32>
    %11 = arith.truncf %8 : vector<128x128xf32> to vector<128x128xbf16>
    %cst_9 = arith.constant dense<0.000000e+00> : vector<128x256xf32>
    %12 = tpu.matmul %11, %9, %cst_9 {dimension_numbers = #tpu.dot_dimension_numbers<[1], [0], [0], [1], [0, 0, 1, 1], [], []>} : vector<128x128xbf16>, vector<128x256xbf16>, vector<128x256xf32> -> vector<128x256xf32>
    %13 = vector.broadcast %10 : vector<1x256xf32> to vector<128x256xf32>
    %14 = arith.addf %12, %13 : vector<128x256xf32>
    %15 = vector.extract_strided_slice %14 {offsets = [0, 0], sizes = [128, 128], strides = [1, 1]} : vector<128x256xf32> to vector<128x128xf32>
    %16 = vector.extract_strided_slice %14 {offsets = [0, 128], sizes = [128, 128], strides = [1, 1]} : vector<128x256xf32> to vector<128x128xf32>
    %c0_10 = arith.constant 0 : index
    %c0_11 = arith.constant 0 : index
    %17 = vector.load %arg2[%c0_10, %c0_11] : memref<128x128xf32, #tpu.memory_space<vmem>>, vector<128x128xf32>
    %cst_12 = arith.constant 5.000000e-01 : f32
    %18 = vector.broadcast %cst_12 : f32 to vector<128x128xf32>
    %19 = arith.mulf %16, %18 : vector<128x128xf32>
    %20 = math.exp %19 : vector<128x128xf32>
    %21 = arith.mulf %17, %20 : vector<128x128xf32>
    %22 = arith.addf %15, %21 : vector<128x128xf32>
    %c0_13 = arith.constant 0 : index
    %c384 = arith.constant 384 : index
    %23 = vector.load %arg3[%c0_13, %c384] : memref<256x896xbf16, #tpu.memory_space<vmem>>, vector<128x128xbf16>
    %c0_14 = arith.constant 0 : index
    %c384_15 = arith.constant 384 : index
    %24 = vector.load %arg4[%c0_14, %c384_15] : memref<1x896xf32, #tpu.memory_space<vmem>>, vector<1x128xf32>
    %25 = arith.truncf %22 : vector<128x128xf32> to vector<128x128xbf16>
    %cst_16 = arith.constant dense<0.000000e+00> : vector<128x128xf32>
    %26 = tpu.matmul %25, %23, %cst_16 {dimension_numbers = #tpu.dot_dimension_numbers<[1], [0], [0], [1], [0, 0, 1, 1], [], []>} : vector<128x128xbf16>, vector<128x128xbf16>, vector<128x128xf32> -> vector<128x128xf32>
    %27 = vector.broadcast %24 : vector<1x128xf32> to vector<128x128xf32>
    %28 = arith.addf %26, %27 : vector<128x128xf32>
    %c0_17 = arith.constant 0 : index
    %c512 = arith.constant 512 : index
    %29 = vector.load %arg3[%c0_17, %c512] : memref<256x896xbf16, #tpu.memory_space<vmem>>, vector<128x128xbf16>
    %c0_18 = arith.constant 0 : index
    %c512_19 = arith.constant 512 : index
    %30 = vector.load %arg4[%c0_18, %c512_19] : memref<1x896xf32, #tpu.memory_space<vmem>>, vector<1x128xf32>
    %31 = arith.truncf %28 : vector<128x128xf32> to vector<128x128xbf16>
    %cst_20 = arith.constant dense<0.000000e+00> : vector<128x128xf32>
    %32 = tpu.matmul %31, %29, %cst_20 {dimension_numbers = #tpu.dot_dimension_numbers<[1], [0], [0], [1], [0, 0, 1, 1], [], []>} : vector<128x128xbf16>, vector<128x128xbf16>, vector<128x128xf32> -> vector<128x128xf32>
    %33 = vector.broadcast %30 : vector<1x128xf32> to vector<128x128xf32>
    %34 = arith.addf %32, %33 : vector<128x128xf32>
    %cst_21 = arith.constant 0.000000e+00 : f32
    %35 = vector.broadcast %cst_21 : f32 to vector<128x128xf32>
    %36 = arith.maximumf %34, %35 : vector<128x128xf32>
    %c0_22 = arith.constant 0 : index
    %c640 = arith.constant 640 : index
    %37 = vector.load %arg3[%c0_22, %c640] : memref<256x896xbf16, #tpu.memory_space<vmem>>, vector<128x256xbf16>
    %c0_23 = arith.constant 0 : index
    %c640_24 = arith.constant 640 : index
    %38 = vector.load %arg4[%c0_23, %c640_24] : memref<1x896xf32, #tpu.memory_space<vmem>>, vector<1x256xf32>
    %39 = arith.truncf %36 : vector<128x128xf32> to vector<128x128xbf16>
    %cst_25 = arith.constant dense<0.000000e+00> : vector<128x256xf32>
    %40 = tpu.matmul %39, %37, %cst_25 {dimension_numbers = #tpu.dot_dimension_numbers<[1], [0], [0], [1], [0, 0, 1, 1], [], []>} : vector<128x128xbf16>, vector<128x256xbf16>, vector<128x256xf32> -> vector<128x256xf32>
    %41 = vector.broadcast %38 : vector<1x256xf32> to vector<128x256xf32>
    %42 = arith.addf %40, %41 : vector<128x256xf32>
    %c0_26 = arith.constant 0 : index
    %c0_27 = arith.constant 0 : index
    %43 = vector.load %arg5[%c0_26, %c0_27] : memref<128x256xf32, #tpu.memory_space<vmem>>, vector<128x256xf32>
    tpu.vector_store %arg5[%c0_26, %c0_27], %42 {strides = array<i32>} : memref<128x256xf32, #tpu.memory_space<vmem>>, vector<128x256xf32>,
    %c0_28 = arith.constant 0 : index
    %c0_29 = arith.constant 0 : index
    %44 = vector.load %arg6[%c0_28, %c0_29] : memref<128x128xf32, #tpu.memory_space<vmem>>, vector<128x128xf32>
    tpu.vector_store %arg6[%c0_28, %c0_29], %15 {strides = array<i32>} : memref<128x128xf32, #tpu.memory_space<vmem>>, vector<128x128xf32>,
    %c0_30 = arith.constant 0 : index
    %c0_31 = arith.constant 0 : index
    %45 = vector.load %arg7[%c0_30, %c0_31] : memref<128x128xf32, #tpu.memory_space<vmem>>, vector<128x128xf32>
    tpu.vector_store %arg7[%c0_30, %c0_31], %16 {strides = array<i32>} : memref<128x128xf32, #tpu.memory_space<vmem>>, vector<128x128xf32>,
    return
  }
  func.func @transform_0(%arg0: i32) -> (i32, i32) {
    %c0_i32 = arith.constant 0 : i32
    %c0_i32_0 = arith.constant 0 : i32
    return %arg0, %c0_i32 : i32, i32
  }
  func.func @transform_1(%arg0: i32) -> (i32, i32) {
    %c0_i32 = arith.constant 0 : i32
    %c0_i32_0 = arith.constant 0 : i32
    return %arg0, %c0_i32 : i32, i32
  }
  func.func @transform_2(%arg0: i32) -> (i32, i32) {
    %c0_i32 = arith.constant 0 : i32
    %c0_i32_0 = arith.constant 0 : i32
    %c0_i32_1 = arith.constant 0 : i32
    return %c0_i32, %c0_i32_0 : i32, i32
  }
  func.func @transform_3(%arg0: i32) -> (i32, i32) {
    %c0_i32 = arith.constant 0 : i32
    %c0_i32_0 = arith.constant 0 : i32
    %c0_i32_1 = arith.constant 0 : i32
    return %c0_i32, %c0_i32_0 : i32, i32
  }
  func.func @transform_4(%arg0: i32) -> (i32, i32) {
    %c0_i32 = arith.constant 0 : i32
    %c0_i32_0 = arith.constant 0 : i32
    return %arg0, %c0_i32 : i32, i32
  }
  func.func @transform_5(%arg0: i32) -> (i32, i32) {
    %c0_i32 = arith.constant 0 : i32
    %c0_i32_0 = arith.constant 0 : i32
    return %arg0, %c0_i32 : i32, i32
  }
  func.func @transform_6(%arg0: i32) -> (i32, i32) {
    %c0_i32 = arith.constant 0 : i32
    %c0_i32_0 = arith.constant 0 : i32
    return %arg0, %c0_i32 : i32, i32
  }
}

</mosaic_0001>

<llo_original>
// kernel: tpu_custom_call.1
$region0: #{tpu_custom_call.1}
  #allocation0 [shape = 'u32[]', space=smem, size = 0x4, offset = 0x4, fixed_abs, tag = 'smem constant byte address 0x4 - core index']
  #allocation1 [shape = 'u32[144,128]{1,0:T(1,128)}', space=vmem, size = 0x12000, scoped, tag = 'internal scratch']
  %s0 = inlined_call_operand.hbm [shape: f32[256,256], index: 0, kind: input, shape index: {}]
  %s1 = inlined_call_operand.hbm [shape: f32[256,128], index: 1, kind: input, shape index: {}]
  %s2 = inlined_call_operand.hbm [shape: bf16[256,896], index: 2, kind: input, shape index: {}]
  %s3 = inlined_call_operand.vmem [shape: f32[1,896], index: 3, kind: input, shape index: {}]
  %s4 = inlined_call_operand.hbm [shape: f32[256,256], index: 4, kind: output, shape index: {0}]
  %s5 = inlined_call_operand.hbm [shape: f32[256,128], index: 5, kind: output, shape index: {1}]
  %s6 = inlined_call_operand.hbm [shape: f32[256,128], index: 6, kind: output, shape index: {2}]
  %7 = xla_tuple %s4, %s5, %s6
  %s8 = sld [smem:[#allocation0]]
  $region77: #{tpu_custom_call.1} parent=0
    _
  %s10 = ssub.s32 1, %s8
  %s11 = scalar_select 0, %s10, %s8
  $region1: #{tpu_custom_call.1} parent=0
    #allocation2 [shape = 'u8[262144]{0}', space=vmem, size = 0x40000, scoped, tag = 'input window, operand 0']
    #allocation3 [shape = 's32[2]{0}', space=sflag, size = 0x8, scoped, tag = 'scoped memory for tpu_custom_call.1']
    #allocation4 [shape = 's32[2]{0}', space=sflag, size = 0x8, scoped, tag = 'scoped memory for tpu_custom_call.1']
    #allocation5 [shape = 'u8[131072]{0}', space=vmem, size = 0x20000, scoped, tag = 'input window, operand 1']
    #allocation6 [shape = 's32[2]{0}', space=sflag, size = 0x8, scoped, tag = 'scoped memory for tpu_custom_call.1']
    #allocation7 [shape = 'u8[458752]{0}', space=vmem, size = 0x70000, scoped, tag = 'input window, operand 2, single buffered']
    #allocation8 [shape = 'u8[262144]{0}', space=vmem, size = 0x40000, scoped, tag = 'output window, operand 0']
    #allocation9 [shape = 'u8[131072]{0}', space=vmem, size = 0x20000, scoped, tag = 'output window, operand 1']
    #allocation10 [shape = 's32[2]{0}', space=sflag, size = 0x8, scoped, tag = 'scoped memory for tpu_custom_call.1']
    #allocation11 [shape = 'u8[131072]{0}', space=vmem, size = 0x20000, scoped, tag = 'output window, operand 2']
    %12 = vsyncpa [#allocation3], 0
    %s13 = scalar_lea.sflag [#allocation3], 1
    %14 = vsyncpa %s13, 0
    %15 = vsyncpa [#allocation6], 0
    %s16 = scalar_lea.sflag [#allocation6], 1
    %17 = vsyncpa %s16, 0
    %18 = vsyncpa [#allocation4], 0
    %s19 = scalar_lea.sflag [#allocation4], 1
    %20 = vsyncpa %s19, 0
    %21 = vsyncpa [#allocation10], 0
    %s22 = scalar_lea.sflag [#allocation10], 1
    %23 = vsyncpa %s22, 0
    loop: start=0, step=1, limit=4
    $region2: #{tpu_custom_call.1} parent=1 // loop_pre_header
      _
    $region3: #{tpu_custom_call.1} parent=1 // loop_header
      %s25 = sphi 0, %s29
      %p26 = scmp.ge.s32.totalorder %s25, 4
      %s35 = sphi 0, %s37
      %s38 = sphi 0, %s35
      %s39 = sphi 0, %s38
      %s55 = sphi 0, %s39
      %s61 = sphi 0, %s63
      %s64 = sphi 0, %s61
      %s65 = sphi 0, %s64
      %s81 = sphi 0, %s65
      %s85 = sphi 0, %s85
      %s87 = sphi 0, %s85
      %s88 = sphi 0, %s87
      %s102 = sphi 0, %s88
      %s106 = sphi 0, %s106
      %s108 = sphi 0, %s106
      %s109 = sphi 0, %s108
      %s123 = sphi 0, %s109
      %s129 = sphi 0, %s131
      %s132 = sphi 0, %s129
      %s133 = sphi 0, %s132
      %s149 = sphi 0, %s133
      %s155 = sphi 0, %s157
      %s158 = sphi 0, %s155
      %s159 = sphi 0, %s158
      %s175 = sphi 0, %s159
      %s181 = sphi 0, %s183
      %s184 = sphi 0, %s181
      %s185 = sphi 0, %s184
      %s201 = sphi 0, %s185
    $region4: #{tpu_custom_call.1} parent=1 // loop_header_branch
      %28 = sbr.rel (%p26) target = $region8
    $region5: #{tpu_custom_call.1} parent=1 // loop_body
      %s30 = ssub.s32 %s25, 1
      %s31 = ssub.s32 %s25, 2
      %s32 = sadd.s32 %s25, 1
      %s33 = ssub.s32 %s25, %s32
      %p34 = scmp.eq.s32.totalorder %s33, 0
      %s36 = sadd.s32 %s35, 1
      %s37 = scalar_select %p34, %s35, %s36
      %p40 = pneg %p34
      %p41 = scmp.eq.s32.totalorder %s25, 1
      %p42 = por %p40, %p41
      %p43 = scmp.ne.s32.totalorder %s35, %s38
      %p44 = scmp.eq.s32.totalorder %s25, 0
      %p45 = por %p43, %p44
      %p46 = scmp.ne.s32.totalorder %s35, %s38
      %p47 = scmp.eq.s32.totalorder %s30, 1
      %p48 = por %p46, %p47
      %p49 = scmp.ne.s32.totalorder %s38, %s39
      %p50 = scmp.eq.s32.totalorder %s30, 0
      %p51 = por %p49, %p50
      %p52 = scmp.ne.s32.totalorder %s38, %s39
      %p53 = scmp.eq.s32.totalorder %s31, 1
      %p54 = por %p52, %p53
      %p56 = scmp.ne.s32.totalorder %s39, %s55
      %p57 = scmp.eq.s32.totalorder %s31, 0
      %p58 = por %p56, %p57
      %s59 = ssub.s32 %s25, %s32
      %p60 = scmp.eq.s32.totalorder %s59, 0
      %s62 = sadd.s32 %s61, 1
      %s63 = scalar_select %p60, %s61, %s62
      %p66 = pneg %p60
      %p67 = scmp.eq.s32.totalorder %s25, 1
      %p68 = por %p66, %p67
      %p69 = scmp.ne.s32.totalorder %s61, %s64
      %p70 = scmp.eq.s32.totalorder %s25, 0
      %p71 = por %p69, %p70
      %p72 = scmp.ne.s32.totalorder %s61, %s64
      %p73 = scmp.eq.s32.totalorder %s30, 1
      %p74 = por %p72, %p73
      %p75 = scmp.ne.s32.totalorder %s64, %s65
      %p76 = scmp.eq.s32.totalorder %s30, 0
      %p77 = por %p75, %p76
      %p78 = scmp.ne.s32.totalorder %s64, %s65
      %p79 = scmp.eq.s32.totalorder %s31, 1
      %p80 = por %p78, %p79
      %p82 = scmp.ne.s32.totalorder %s65, %s81
      %p83 = scmp.eq.s32.totalorder %s31, 0
      %p84 = por %p82, %p83
      %s86 = sadd.s32 %s85, 1
      %p89 = scmp.eq.s32.totalorder %s25, 1
      %p90 = scmp.ne.s32.totalorder %s85, %s87
      %p91 = scmp.eq.s32.totalorder %s25, 0
      %p92 = por %p90, %p91
      %p93 = scmp.ne.s32.totalorder %s85, %s87
      %p94 = scmp.eq.s32.totalorder %s30, 1
      %p95 = por %p93, %p94
      %p96 = scmp.ne.s32.totalorder %s87, %s88
      %p97 = scmp.eq.s32.totalorder %s30, 0
      %p98 = por %p96, %p97
      %p99 = scmp.ne.s32.totalorder %s87, %s88
      %p100 = scmp.eq.s32.totalorder %s31, 1
      %p101 = por %p99, %p100
      %p103 = scmp.ne.s32.totalorder %s88, %s102
      %p104 = scmp.eq.s32.totalorder %s31, 0
      %p105 = por %p103, %p104
      %s107 = sadd.s32 %s106, 1
      %p110 = scmp.eq.s32.totalorder %s25, 1
      %p111 = scmp.ne.s32.totalorder %s106, %s108
      %p112 = scmp.eq.s32.totalorder %s25, 0
      %p113 = por %p111, %p112
      %p114 = scmp.ne.s32.totalorder %s106, %s108
      %p115 = scmp.eq.s32.totalorder %s30, 1
      %p116 = por %p114, %p115
      %p117 = scmp.ne.s32.totalorder %s108, %s109
      %p118 = scmp.eq.s32.totalorder %s30, 0
      %p119 = por %p117, %p118
      %p120 = scmp.ne.s32.totalorder %s108, %s109
      %p121 = scmp.eq.s32.totalorder %s31, 1
      %p122 = por %p120, %p121
      %p124 = scmp.ne.s32.totalorder %s109, %s123
      %p125 = scmp.eq.s32.totalorder %s31, 0
      %p126 = por %p124, %p125
      %s127 = ssub.s32 %s25, %s32
      %p128 = scmp.eq.s32.totalorder %s127, 0
      %s130 = sadd.s32 %s129, 1
      %s131 = scalar_select %p128, %s129, %s130
      %p134 = pneg %p128
      %p135 = scmp.eq.s32.totalorder %s25, 1
      %p136 = por %p134, %p135
      %p137 = scmp.ne.s32.totalorder %s129, %s132
      %p138 = scmp.eq.s32.totalorder %s25, 0
      %p139 = por %p137, %p138
      %p140 = scmp.ne.s32.totalorder %s129, %s132
      %p141 = scmp.eq.s32.totalorder %s30, 1
      %p142 = por %p140, %p141
      %p143 = scmp.ne.s32.totalorder %s132, %s133
      %p144 = scmp.eq.s32.totalorder %s30, 0
      %p145 = por %p143, %p144
      %p146 = scmp.ne.s32.totalorder %s132, %s133
      %p147 = scmp.eq.s32.totalorder %s31, 1
      %p148 = por %p146, %p147
      %p150 = scmp.ne.s32.totalorder %s133, %s149
      %p151 = scmp.eq.s32.totalorder %s31, 0
      %p152 = por %p150, %p151
      %s153 = ssub.s32 %s25, %s32
      %p154 = scmp.eq.s32.totalorder %s153, 0
      %s156 = sadd.s32 %s155, 1
      %s157 = scalar_select %p154, %s155, %s156
      %p160 = pneg %p154
      %p161 = scmp.eq.s32.totalorder %s25, 1
      %p162 = por %p160, %p161
      %p163 = scmp.ne.s32.totalorder %s155, %s158
      %p164 = scmp.eq.s32.totalorder %s25, 0
      %p165 = por %p163, %p164
      %p166 = scmp.ne.s32.totalorder %s155, %s158
      %p167 = scmp.eq.s32.totalorder %s30, 1
      %p168 = por %p166, %p167
      %p169 = scmp.ne.s32.totalorder %s158, %s159
      %p170 = scmp.eq.s32.totalorder %s30, 0
      %p171 = por %p169, %p170
      %p172 = scmp.ne.s32.totalorder %s158, %s159
      %p173 = scmp.eq.s32.totalorder %s31, 1
      %p174 = por %p172, %p173
      %p176 = scmp.ne.s32.totalorder %s159, %s175
      %p177 = scmp.eq.s32.totalorder %s31, 0
      %p178 = por %p176, %p177
      %s179 = ssub.s32 %s25, %s32
      %p180 = scmp.eq.s32.totalorder %s179, 0
      %s182 = sadd.s32 %s181, 1
      %s183 = scalar_select %p180, %s181, %s182
      %p186 = pneg %p180
      %p187 = scmp.eq.s32.totalorder %s25, 1
      %p188 = por %p186, %p187
      %p189 = scmp.ne.s32.totalorder %s181, %s184
      %p190 = scmp.eq.s32.totalorder %s25, 0
      %p191 = por %p189, %p190
      %p192 = scmp.ne.s32.totalorder %s181, %s184
      %p193 = scmp.eq.s32.totalorder %s30, 1
      %p194 = por %p192, %p193
      %p195 = scmp.ne.s32.totalorder %s184, %s185
      %p196 = scmp.eq.s32.totalorder %s30, 0
      %p197 = por %p195, %p196
      %p198 = scmp.ne.s32.totalorder %s184, %s185
      %p199 = scmp.eq.s32.totalorder %s31, 1
      %p200 = por %p198, %p199
      %p202 = scmp.ne.s32.totalorder %s185, %s201
      %p203 = scmp.eq.s32.totalorder %s31, 0
      %p204 = por %p202, %p203
      %p205 = scmp.le.s32.totalorder 1, %s25
      %p206 = scmp.lt.s32.totalorder %s25, 3
      %p207 = pnand %p205, %p206
      %p208 = pneg %p207
      // Predicated region
      $region9: #{tpu_custom_call.1} parent=5 // pred_check
        _
      $region10: #{tpu_custom_call.1} parent=5 // pred_check_branch
        %210 = sbr.rel (%p207) target = $region12
      $region11: #{tpu_custom_call.1} parent=5 // pred_region
        %s211 = ssub.s32 %s25, 1
        // Predicated region
        $region13: #{tpu_custom_call.1} parent=11 // pred_check
          %p212 = pneg %p98
        $region14: #{tpu_custom_call.1} parent=11 // pred_check_branch
          %214 = sbr.rel (%p212) target = $region16
        $region15: #{tpu_custom_call.1} parent=11 // pred_region
          %s216 = ssub.s32 14336, 14336
          %217 = vsyncadd [#allocation6], %s216
          %s218 = sshll.u32 [#allocation7], 4
          %s219 = int_to_ptr.vmem [resolvable:$true] %s218
          %224 = dma.hbm_to_vmem [thread:$0]  %s2, 14336, %s219, [#allocation6], 448, 448, 28
        $region16: #{tpu_custom_call.1} parent=11 // pred_fallthru
          _
        // Predicated region
        $region17: #{tpu_custom_call.1} parent=11 // pred_check
          %p225 = pneg %p119
        $region18: #{tpu_custom_call.1} parent=11 // pred_check_branch
          %227 = sbr.rel (%p225) target = $region20
        $region19: #{tpu_custom_call.1} parent=11 // pred_region
          _
        $region20: #{tpu_custom_call.1} parent=11 // pred_fallthru
          _
      $region12: #{tpu_custom_call.1} parent=5 // pred_fallthru
        _
      %p228 = scmp.lt.s32.totalorder %s25, 2
      // Predicated region
      $region21: #{tpu_custom_call.1} parent=5 // pred_check
        %p229 = pneg %p228
      $region22: #{tpu_custom_call.1} parent=5 // pred_check_branch
        %231 = sbr.rel (%p229) target = $region24
      $region23: #{tpu_custom_call.1} parent=5 // pred_region
        // Predicated region
        $region25: #{tpu_custom_call.1} parent=23 // pred_check
          %p232 = pneg %p45
        $region26: #{tpu_custom_call.1} parent=23 // pred_check_branch
          %234 = sbr.rel (%p232) target = $region28
        $region27: #{tpu_custom_call.1} parent=23 // pred_region
          %s235 = sand.u32 %s35, 1
          %s236 = scalar_lea.sflag [#allocation3], %s235
          %s237 = sand.u32 %s35, 1
          %s238 = smul.addr %s237, 256
          %s239 = scalar_lea.vmem [#allocation2], %s238
          %s240 = smul.u32 16, %s25
          %s242 = ssub.s32 4096, 4096
          %243 = vsyncadd %s236, %s242
          %s244 = smul.addr %s240, 2
          %s245 = smul.addr %s244, 128
          %s246 = scalar_lea.hbm %s0, %s245
          %s247 = sshll.u32 %s239, 4
          %s248 = int_to_ptr.vmem [resolvable:$true] %s247
          %253 = dma.hbm_to_vmem [thread:$0]  %s246, 4096, %s248, %s236, 256, 256, 16
        $region28: #{tpu_custom_call.1} parent=23 // pred_fallthru
          _
        // Predicated region
        $region29: #{tpu_custom_call.1} parent=23 // pred_check
          %p254 = pneg %p71
        $region30: #{tpu_custom_call.1} parent=23 // pred_check_branch
          %256 = sbr.rel (%p254) target = $region32
        $region31: #{tpu_custom_call.1} parent=23 // pred_region
          %s257 = sand.u32 %s25, 1
          %s258 = scalar_lea.sflag [#allocation6], %s257
          %s259 = sand.u32 %s61, 1
          %s260 = smul.addr %s259, 128
          %s261 = scalar_lea.vmem [#allocation5], %s260
          %s262 = smul.u32 16, %s25
          %s264 = ssub.s32 2048, 2048
          %265 = vsyncadd %s258, %s264
          %s266 = smul.addr %s262, 128
          %s267 = scalar_lea.hbm %s1, %s266
          %s268 = sshll.u32 %s261, 4
          %s269 = int_to_ptr.vmem [resolvable:$true] %s268
          %274 = dma.hbm_to_vmem [thread:$0]  %s267, 2048, %s269, %s258, 128, 128, 8
        $region32: #{tpu_custom_call.1} parent=23 // pred_fallthru
          _
      $region24: #{tpu_custom_call.1} parent=5 // pred_fallthru
        _
      %p275 = scmp.le.s32.totalorder 1, %s25
      %p276 = scmp.lt.s32.totalorder %s25, 3
      %p277 = pnand %p275, %p276
      %p278 = pneg %p277
      // Predicated region
      $region33: #{tpu_custom_call.1} parent=5 // pred_check
        _
      $region34: #{tpu_custom_call.1} parent=5 // pred_check_branch
        %280 = sbr.rel (%p277) target = $region36
      $region35: #{tpu_custom_call.1} parent=5 // pred_region
        %s281 = ssub.s32 %s25, 1
        %s282 = sand.u32 %s38, 1
        %s283 = scalar_lea.sflag [#allocation3], %s282
        %s284 = sand.u32 %s38, 1
        %s285 = smul.addr %s284, 256
        %s286 = scalar_lea.vmem [#allocation2], %s285
        // Predicated region
        $region37: #{tpu_custom_call.1} parent=35 // pred_check
          %p287 = pneg %p51
        $region38: #{tpu_custom_call.1} parent=35 // pred_check_branch
          %289 = sbr.rel (%p287) target = $region40
        $region39: #{tpu_custom_call.1} parent=35 // pred_region
          %290 = dma.done %s283, 4096
        $region40: #{tpu_custom_call.1} parent=35 // pred_fallthru
          _
        %s291 = sand.u32 %s30, 1
        %s292 = scalar_lea.sflag [#allocation6], %s291
        %s293 = sand.u32 %s64, 1
        %s294 = smul.addr %s293, 128
        %s295 = scalar_lea.vmem [#allocation5], %s294
        // Predicated region
        $region41: #{tpu_custom_call.1} parent=35 // pred_check
          %p296 = pneg %p77
        $region42: #{tpu_custom_call.1} parent=35 // pred_check_branch
          %298 = sbr.rel (%p296) target = $region44
        $region43: #{tpu_custom_call.1} parent=35 // pred_region
          %299 = dma.done %s292, 2048
        $region44: #{tpu_custom_call.1} parent=35 // pred_fallthru
          _
        // Predicated region
        $region45: #{tpu_custom_call.1} parent=35 // pred_check
          %p300 = pneg %p98
        $region46: #{tpu_custom_call.1} parent=35 // pred_check_branch
          %302 = sbr.rel (%p300) target = $region48
        $region47: #{tpu_custom_call.1} parent=35 // pred_region
          %303 = dma.done [#allocation6], 14336
        $region48: #{tpu_custom_call.1} parent=35 // pred_fallthru
          _
        %s304 = sand.u32 %s38, 1
        %s305 = scalar_lea.sflag [#allocation3], %s304
        %s306 = sand.u32 %s38, 1
        %s307 = smul.addr %s306, 256
        %s308 = scalar_lea.vmem [#allocation2], %s307
        %p309 = pneg %p51
        %p310 = pneg %p48
        %s311 = sand.u32 %s30, 1
        %s312 = scalar_lea.sflag [#allocation6], %s311
        %s313 = sand.u32 %s64, 1
        %s314 = smul.addr %s313, 128
        %s315 = scalar_lea.vmem [#allocation5], %s314
        %p316 = pneg %p77
        %p317 = pneg %p74
        %p318 = pneg %p98
        %p319 = pneg %p95
        %p320 = pneg %p119
        %p321 = pneg %p116
        %p322 = pneg %p145
        %p323 = pneg %p142
        %s324 = sand.u32 %s132, 1
        %s325 = scalar_lea.sflag [#allocation4], %s324
        %s326 = sand.u32 %s132, 1
        %s327 = smul.addr %s326, 256
        %s328 = scalar_lea.vmem [#allocation8], %s327
        %p329 = pneg %p171
        %p330 = pneg %p168
        %s331 = sand.u32 %s30, 1
        %s332 = scalar_lea.sflag [#allocation10], %s331
        %s333 = sand.u32 %s158, 1
        %s334 = smul.addr %s333, 128
        %s335 = scalar_lea.vmem [#allocation9], %s334
        %p336 = pneg %p197
        %p337 = pneg %p194
        %s338 = sand.u32 %s30, 1
        %s339 = scalar_lea.sflag [#allocation10], %s338
        %s340 = sand.u32 %s184, 1
        %s341 = smul.addr %s340, 128
        %s342 = scalar_lea.vmem [#allocation11], %s341
        %s343 = smul.u32 16, %s30
        %s344 = smul.u32 16, %s30
        %s345 = smul.u32 16, %s30
        %s346 = smul.u32 16, %s30
        %s347 = smul.u32 16, %s30
        %v349 = vld [vmem:[%s286] sm:$0xff]
        %v350 = vld [vmem:[%s286 + $0x8] sm:$0xff]
        %v351 = vld [vmem:[%s286 + $0x10] sm:$0xff]
        %v352 = vld [vmem:[%s286 + $0x18] sm:$0xff]
        %v353 = vld [vmem:[%s286 + $0x20] sm:$0xff]
        %v354 = vld [vmem:[%s286 + $0x28] sm:$0xff]
        %v355 = vld [vmem:[%s286 + $0x30] sm:$0xff]
        %v356 = vld [vmem:[%s286 + $0x38] sm:$0xff]
        %v357 = vld [vmem:[%s286 + $0x40] sm:$0xff]
        %v358 = vld [vmem:[%s286 + $0x48] sm:$0xff]
        %v359 = vld [vmem:[%s286 + $0x50] sm:$0xff]
        %v360 = vld [vmem:[%s286 + $0x58] sm:$0xff]
        %v361 = vld [vmem:[%s286 + $0x60] sm:$0xff]
        %v362 = vld [vmem:[%s286 + $0x68] sm:$0xff]
        %v363 = vld [vmem:[%s286 + $0x70] sm:$0xff]
        %v364 = vld [vmem:[%s286 + $0x78] sm:$0xff]
        %v365 = vld [vmem:[%s286 + $0x80] sm:$0xff]
        %v366 = vld [vmem:[%s286 + $0x88] sm:$0xff]
        %v367 = vld [vmem:[%s286 + $0x90] sm:$0xff]
        %v368 = vld [vmem:[%s286 + $0x98] sm:$0xff]
        %v369 = vld [vmem:[%s286 + $0xa0] sm:$0xff]
        %v370 = vld [vmem:[%s286 + $0xa8] sm:$0xff]
        %v371 = vld [vmem:[%s286 + $0xb0] sm:$0xff]
        %v372 = vld [vmem:[%s286 + $0xb8] sm:$0xff]
        %v373 = vld [vmem:[%s286 + $0xc0] sm:$0xff]
        %v374 = vld [vmem:[%s286 + $0xc8] sm:$0xff]
        %v375 = vld [vmem:[%s286 + $0xd0] sm:$0xff]
        %v376 = vld [vmem:[%s286 + $0xd8] sm:$0xff]
        %v377 = vld [vmem:[%s286 + $0xe0] sm:$0xff]
        %v378 = vld [vmem:[%s286 + $0xe8] sm:$0xff]
        %v379 = vld [vmem:[%s286 + $0xf0] sm:$0xff]
        %v380 = vld [vmem:[%s286 + $0xf8] sm:$0xff]
        %v381 = vld [vmem:[#allocation7] sm:$0xf]
        %v382 = vld [vmem:[#allocation7 + $0x1c] sm:$0xf]
        %v383 = vld [vmem:[#allocation7 + $0x38] sm:$0xf]
        %v384 = vld [vmem:[#allocation7 + $0x54] sm:$0xf]
        %v385 = vld [vmem:[#allocation7 + $0x70] sm:$0xf]
        %v386 = vld [vmem:[#allocation7 + $0x8c] sm:$0xf]
        %v387 = vld [vmem:[#allocation7 + $0xa8] sm:$0xf]
        %v388 = vld [vmem:[#allocation7 + $0xc4] sm:$0xf]
        %v389 = vld [vmem:[#allocation7 + $0xe0] sm:$0xf]
        %v390 = vld [vmem:[#allocation7 + $0xfc] sm:$0xf]
        %v391 = vld [vmem:[#allocation7 + $0x118] sm:$0xf]
        %v392 = vld [vmem:[#allocation7 + $0x134] sm:$0xf]
        %v393 = vld [vmem:[#allocation7 + $0x150] sm:$0xf]
        %v394 = vld [vmem:[#allocation7 + $0x16c] sm:$0xf]
        %v395 = vld [vmem:[#allocation7 + $0x188] sm:$0xf]
        %v396 = vld [vmem:[#allocation7 + $0x1a4] sm:$0xf]
        %v397 = vld [vmem:[#allocation7 + $0x1c0] sm:$0xf]
        %v398 = vld [vmem:[#allocation7 + $0x1dc] sm:$0xf]
        %v399 = vld [vmem:[#allocation7 + $0x1f8] sm:$0xf]
        %v400 = vld [vmem:[#allocation7 + $0x214] sm:$0xf]
        %v401 = vld [vmem:[#allocation7 + $0x230] sm:$0xf]
        %v402 = vld [vmem:[#allocation7 + $0x24c] sm:$0xf]
        %v403 = vld [vmem:[#allocation7 + $0x268] sm:$0xf]
        %v404 = vld [vmem:[#allocation7 + $0x284] sm:$0xf]
        %v405 = vld [vmem:[#allocation7 + $0x2a0] sm:$0xf]
        %v406 = vld [vmem:[#allocation7 + $0x2bc] sm:$0xf]
        %v407 = vld [vmem:[#allocation7 + $0x2d8] sm:$0xf]
        %v408 = vld [vmem:[#allocation7 + $0x2f4] sm:$0xf]
        %v409 = vld [vmem:[#allocation7 + $0x310] sm:$0xf]
        %v410 = vld [vmem:[#allocation7 + $0x32c] sm:$0xf]
        %v411 = vld [vmem:[#allocation7 + $0x348] sm:$0xf]
        %v412 = vld [vmem:[#allocation7 + $0x364] sm:$0xf]
        %v413 = vld [vmem:[%s3] sm:$0x1]
        %v414 = vpack.c.bf16 %v351, %v349
        %v415 = vpack.c.bf16 %v352, %v350
        %v416 = vpack.c.bf16 %v355, %v353
        %v417 = vpack.c.bf16 %v356, %v354
        %v418 = vpack.c.bf16 %v359, %v357
        %v419 = vpack.c.bf16 %v360, %v358
        %v420 = vpack.c.bf16 %v363, %v361
        %v421 = vpack.c.bf16 %v364, %v362
        %v422 = vpack.c.bf16 %v367, %v365
        %v423 = vpack.c.bf16 %v368, %v366
        %v424 = vpack.c.bf16 %v371, %v369
        %v425 = vpack.c.bf16 %v372, %v370
        %v426 = vpack.c.bf16 %v375, %v373
        %v427 = vpack.c.bf16 %v376, %v374
        %v428 = vpack.c.bf16 %v379, %v377
        %v429 = vpack.c.bf16 %v380, %v378
        %v431 = vlaneseq
        %v432 = vshrl.u32 %v431, 7
        %v433 = vsub.s32 0, %v432
        %v434 = vrot.slane %v413, %v433
        %v468 = vunpack.c.l.b16 %v381
        %v469 = vunpack.c.l.b16 %v382
        %v470 = vunpack.c.l.b16 %v383
        %v471 = vunpack.c.l.b16 %v384
        %v472 = vunpack.c.l.b16 %v385
        %v473 = vunpack.c.l.b16 %v386
        %v474 = vunpack.c.l.b16 %v387
        %v475 = vunpack.c.l.b16 %v388
        %v476 = vunpack.c.l.b16 %v389
        %v477 = vunpack.c.l.b16 %v390
        %v478 = vunpack.c.l.b16 %v391
        %v479 = vunpack.c.l.b16 %v392
        %v480 = vunpack.c.l.b16 %v393
        %v481 = vunpack.c.l.b16 %v394
        %v482 = vunpack.c.l.b16 %v395
        %v483 = vunpack.c.l.b16 %v396
        %v484 = vunpack.c.l.b16 %v397
        %v485 = vunpack.c.l.b16 %v398
        %v486 = vunpack.c.l.b16 %v399
        %v487 = vunpack.c.l.b16 %v400
        %v488 = vunpack.c.l.b16 %v401
        %v489 = vunpack.c.l.b16 %v402
        %v490 = vunpack.c.l.b16 %v403
        %v491 = vunpack.c.l.b16 %v404
        %v492 = vunpack.c.l.b16 %v405
        %v493 = vunpack.c.l.b16 %v406
        %v494 = vunpack.c.l.b16 %v407
        %v495 = vunpack.c.l.b16 %v408
        %v496 = vunpack.c.l.b16 %v409
        %v497 = vunpack.c.l.b16 %v410
        %v498 = vunpack.c.l.b16 %v411
        %v499 = vunpack.c.l.b16 %v412
        %v500 = vpack.c.b16 %v469, %v468
        %v501 = vpack.c.b16 %v471, %v470
        %v502 = vpack.c.b16 %v473, %v472
        %v503 = vpack.c.b16 %v475, %v474
        %v504 = vpack.c.b16 %v477, %v476
        %v505 = vpack.c.b16 %v479, %v478
        %v506 = vpack.c.b16 %v481, %v480
        %v507 = vpack.c.b16 %v483, %v482
        %v508 = vpack.c.b16 %v485, %v484
        %v509 = vpack.c.b16 %v487, %v486
        %v510 = vpack.c.b16 %v489, %v488
        %v511 = vpack.c.b16 %v491, %v490
        %v512 = vpack.c.b16 %v493, %v492
        %v513 = vpack.c.b16 %v495, %v494
        %v514 = vpack.c.b16 %v497, %v496
        %v515 = vpack.c.b16 %v499, %v498
        %532 = vmatprep.subr.bf16.mxu0 0
        %533 = vmatpush1.bf16.msra.mxu0 %v500
        %534 = vmatprep.subr.bf16.mxu0 0
        %535 = vmatpush1.bf16.msra.mxu0 %v501
        %536 = vmatprep.subr.bf16.mxu0 0
        %537 = vmatpush1.bf16.msra.mxu0 %v502
        %538 = vmatprep.subr.bf16.mxu0 0
        %539 = vmatpush1.bf16.msra.mxu0 %v503
        %540 = vmatprep.subr.bf16.mxu0 0
        %541 = vmatpush1.bf16.msra.mxu0 %v504
        %542 = vmatprep.subr.bf16.mxu0 0
        %543 = vmatpush1.bf16.msra.mxu0 %v505
        %544 = vmatprep.subr.bf16.mxu0 0
        %545 = vmatpush1.bf16.msra.mxu0 %v506
        %546 = vmatprep.subr.bf16.mxu0 0
        %547 = vmatpush1.bf16.msra.mxu0 %v507
        %548 = vmatprep.subr.bf16.mxu0 0
        %549 = vmatpush1.bf16.msra.mxu0 %v508
        %550 = vmatprep.subr.bf16.mxu0 0
        %551 = vmatpush1.bf16.msra.mxu0 %v509
        %552 = vmatprep.subr.bf16.mxu0 0
        %553 = vmatpush1.bf16.msra.mxu0 %v510
        %554 = vmatprep.subr.bf16.mxu0 0
        %555 = vmatpush1.bf16.msra.mxu0 %v511
        %556 = vmatprep.subr.bf16.mxu0 0
        %557 = vmatpush1.bf16.msra.mxu0 %v512
        %558 = vmatprep.subr.bf16.mxu0 0
        %559 = vmatpush1.bf16.msra.mxu0 %v513
        %560 = vmatprep.subr.bf16.mxu0 0
        %561 = vmatpush1.bf16.msra.mxu0 %v514
        %562 = vmatprep.subr.bf16.mxu0 0
        %563 = vmatpush1.bf16.msra.mxu0 %v515
        %564 = vmatprep.mubr.bf16.mxu0 %v415
        %565 = vmatmul.mubr.bf16.gmra.mrb[0].mxu0 %v414
        %v566 = vpop.f32.mrb[0].mxu0
        %v567 = vadd.f32 %v434, %v566
        %v568 = vpop.f32.mrb[0].mxu0
        %v569 = vpop.f32.mrb[0].mxu0
        %v570 = vadd.f32 %v434, %v569
        %v571 = vpop.f32.mrb[0].mxu0
        %572 = vmatprep.mubr.bf16.mxu0 %v417
        %573 = vmatmul.mubr.bf16.gmra.mrb[0].mxu0 %v416
        %v574 = vpop.f32.mrb[0].mxu0
        %v575 = vadd.f32 %v434, %v574
        %v576 = vpop.f32.mrb[0].mxu0
        %v577 = vpop.f32.mrb[0].mxu0
        %v578 = vadd.f32 %v434, %v577
        %v579 = vpop.f32.mrb[0].mxu0
        %580 = vmatprep.mubr.bf16.mxu0 %v419
        %581 = vmatmul.mubr.bf16.gmra.mrb[0].mxu0 %v418
        %v582 = vpop.f32.mrb[0].mxu0
        %v583 = vadd.f32 %v434, %v582
        %v584 = vpop.f32.mrb[0].mxu0
        %v585 = vpop.f32.mrb[0].mxu0
        %v586 = vadd.f32 %v434, %v585
        %v587 = vpop.f32.mrb[0].mxu0
        %588 = vmatprep.mubr.bf16.mxu0 %v421
        %589 = vmatmul.mubr.bf16.gmra.mrb[0].mxu0 %v420
        %v590 = vpop.f32.mrb[0].mxu0
        %v591 = vadd.f32 %v434, %v590
        %v592 = vpop.f32.mrb[0].mxu0
        %v593 = vpop.f32.mrb[0].mxu0
        %v594 = vadd.f32 %v434, %v593
        %v595 = vpop.f32.mrb[0].mxu0
        %596 = vmatprep.mubr.bf16.mxu0 %v423
        %597 = vmatmul.mubr.bf16.gmra.mrb[0].mxu0 %v422
        %v598 = vpop.f32.mrb[0].mxu0
        %v599 = vadd.f32 %v434, %v598
        %v600 = vpop.f32.mrb[0].mxu0
        %v601 = vpop.f32.mrb[0].mxu0
        %v602 = vadd.f32 %v434, %v601
        %v603 = vpop.f32.mrb[0].mxu0
        %604 = vmatprep.mubr.bf16.mxu0 %v425
        %605 = vmatmul.mubr.bf16.gmra.mrb[0].mxu0 %v424
        %v606 = vpop.f32.mrb[0].mxu0
        %v607 = vadd.f32 %v434, %v606
        %v608 = vpop.f32.mrb[0].mxu0
        %v609 = vpop.f32.mrb[0].mxu0
        %v610 = vadd.f32 %v434, %v609
        %v611 = vpop.f32.mrb[0].mxu0
        %612 = vmatprep.mubr.bf16.mxu0 %v427
        %613 = vmatmul.mubr.bf16.gmra.mrb[0].mxu0 %v426
        %v614 = vpop.f32.mrb[0].mxu0
        %v615 = vadd.f32 %v434, %v614
        %v616 = vpop.f32.mrb[0].mxu0
        %v617 = vpop.f32.mrb[0].mxu0
        %v618 = vadd.f32 %v434, %v617
        %v619 = vpop.f32.mrb[0].mxu0
        %620 = vmatprep.mubr.bf16.mxu0 %v429
        %621 = vmatmul.mubr.bf16.gmra.mrb[0].mxu0 %v428
        %v622 = vpop.f32.mrb[0].mxu0
        %v623 = vadd.f32 %v434, %v622
        %v624 = vpop.f32.mrb[0].mxu0
        %v625 = vpop.f32.mrb[0].mxu0
        %v626 = vadd.f32 %v434, %v625
        %v627 = vpop.f32.mrb[0].mxu0
        %628 = vdwg.mxu0
        %v629 = vmax.f32 %v567, 0.0
        %v630 = vmax.f32 %v570, 0.0
        %v631 = vmax.f32 %v575, 0.0
        %v632 = vmax.f32 %v578, 0.0
        %v633 = vmax.f32 %v583, 0.0
        %v634 = vmax.f32 %v586, 0.0
        %v635 = vmax.f32 %v591, 0.0
        %v636 = vmax.f32 %v594, 0.0
        %v637 = vmax.f32 %v599, 0.0
        %v638 = vmax.f32 %v602, 0.0
        %v639 = vmax.f32 %v607, 0.0
        %v640 = vmax.f32 %v610, 0.0
        %v641 = vmax.f32 %v615, 0.0
        %v642 = vmax.f32 %v618, 0.0
        %v643 = vmax.f32 %v623, 0.0
        %v644 = vmax.f32 %v626, 0.0
        %v645 = vld [vmem:[#allocation7 + $0x4] sm:$0xff]
        %v646 = vld [vmem:[#allocation7 + $0x20] sm:$0xff]
        %v647 = vld [vmem:[#allocation7 + $0x3c] sm:$0xff]
        %v648 = vld [vmem:[#allocation7 + $0x58] sm:$0xff]
        %v649 = vld [vmem:[#allocation7 + $0x74] sm:$0xff]
        %v650 = vld [vmem:[#allocation7 + $0x90] sm:$0xff]
        %v651 = vld [vmem:[#allocation7 + $0xac] sm:$0xff]
        %v652 = vld [vmem:[#allocation7 + $0xc8] sm:$0xff]
        %v653 = vld [vmem:[#allocation7 + $0xe4] sm:$0xff]
        %v654 = vld [vmem:[#allocation7 + $0x100] sm:$0xff]
        %v655 = vld [vmem:[#allocation7 + $0x11c] sm:$0xff]
        %v656 = vld [vmem:[#allocation7 + $0x138] sm:$0xff]
        %v657 = vld [vmem:[#allocation7 + $0x154] sm:$0xff]
        %v658 = vld [vmem:[#allocation7 + $0x170] sm:$0xff]
        %v659 = vld [vmem:[#allocation7 + $0x18c] sm:$0xff]
        %v660 = vld [vmem:[#allocation7 + $0x1a8] sm:$0xff]
        %v661 = vld [vmem:[%s3 + $0x1] sm:$0x3]
        %v662 = vpack.c.bf16 %v630, %v629
        %v663 = vpack.c.bf16 %v632, %v631
        %v664 = vpack.c.bf16 %v634, %v633
        %v665 = vpack.c.bf16 %v636, %v635
        %v666 = vpack.c.bf16 %v638, %v637
        %v667 = vpack.c.bf16 %v640, %v639
        %v668 = vpack.c.bf16 %v642, %v641
        %v669 = vpack.c.bf16 %v644, %v643
        %v671 = vlaneseq
        %v672 = vshrl.u32 %v671, 7
        %v673 = vsub.s32 0, %v672
        %v674 = vrot.slane %v661, %v673
        %v675 = vlaneseq
        %v676 = vshrl.u32 %v675, 7
        %v677 = vsub.s32 1, %v676
        %v678 = vrot.slane %v661, %v677
        %v697 = vunpack.c.l.b16 %v645
        %v698 = vunpack.c.h.b16 %v645
        %v699 = vunpack.c.l.b16 %v646
        %v700 = vunpack.c.h.b16 %v646
        %v701 = vunpack.c.l.b16 %v647
        %v702 = vunpack.c.h.b16 %v647
        %v703 = vunpack.c.l.b16 %v648
        %v704 = vunpack.c.h.b16 %v648
        %v705 = vunpack.c.l.b16 %v649
        %v706 = vunpack.c.h.b16 %v649
        %v707 = vunpack.c.l.b16 %v650
        %v708 = vunpack.c.h.b16 %v650
        %v709 = vunpack.c.l.b16 %v651
        %v710 = vunpack.c.h.b16 %v651
        %v711 = vunpack.c.l.b16 %v652
        %v712 = vunpack.c.h.b16 %v652
        %v713 = vunpack.c.l.b16 %v653
        %v714 = vunpack.c.h.b16 %v653
        %v715 = vunpack.c.l.b16 %v654
        %v716 = vunpack.c.h.b16 %v654
        %v717 = vunpack.c.l.b16 %v655
        %v718 = vunpack.c.h.b16 %v655
        %v719 = vunpack.c.l.b16 %v656
        %v720 = vunpack.c.h.b16 %v656
        %v721 = vunpack.c.l.b16 %v657
        %v722 = vunpack.c.h.b16 %v657
        %v723 = vunpack.c.l.b16 %v658
        %v724 = vunpack.c.h.b16 %v658
        %v725 = vunpack.c.l.b16 %v659
        %v726 = vunpack.c.h.b16 %v659
        %v727 = vunpack.c.l.b16 %v660
        %v728 = vunpack.c.h.b16 %v660
        %v729 = vpack.c.b16 %v699, %v697
        %v730 = vpack.c.b16 %v700, %v698
        %v731 = vpack.c.b16 %v703, %v701
        %v732 = vpack.c.b16 %v704, %v702
        %v733 = vpack.c.b16 %v707, %v705
        %v734 = vpack.c.b16 %v708, %v706
        %v735 = vpack.c.b16 %v711, %v709
        %v736 = vpack.c.b16 %v712, %v710
        %v737 = vpack.c.b16 %v715, %v713
        %v738 = vpack.c.b16 %v716, %v714
        %v739 = vpack.c.b16 %v719, %v717
        %v740 = vpack.c.b16 %v720, %v718
        %v741 = vpack.c.b16 %v723, %v721
        %v742 = vpack.c.b16 %v724, %v722
        %v743 = vpack.c.b16 %v727, %v725
        %v744 = vpack.c.b16 %v728, %v726
        %761 = vmatprep.subr.bf16.mxu0 %v730
        %762 = vmatpush1.bf16.msra.mxu0 %v729
        %763 = vmatprep.subr.bf16.mxu0 %v732
        %764 = vmatpush1.bf16.msra.mxu0 %v731
        %765 = vmatprep.subr.bf16.mxu0 %v734
        %766 = vmatpush1.bf16.msra.mxu0 %v733
        %767 = vmatprep.subr.bf16.mxu0 %v736
        %768 = vmatpush1.bf16.msra.mxu0 %v735
        %769 = vmatprep.subr.bf16.mxu0 %v738
        %770 = vmatpush1.bf16.msra.mxu0 %v737
        %771 = vmatprep.subr.bf16.mxu0 %v740
        %772 = vmatpush1.bf16.msra.mxu0 %v739
        %773 = vmatprep.subr.bf16.mxu0 %v742
        %774 = vmatpush1.bf16.msra.mxu0 %v741
        %775 = vmatprep.subr.bf16.mxu0 %v744
        %776 = vmatpush1.bf16.msra.mxu0 %v743
        %777 = vmatprep.subr.bf16.mxu0 0
        %778 = vmatpush1.bf16.msra.mxu0 0
        %779 = vmatprep.subr.bf16.mxu0 0
        %780 = vmatpush1.bf16.msra.mxu0 0
        %781 = vmatprep.subr.bf16.mxu0 0
        %782 = vmatpush1.bf16.msra.mxu0 0
        %783 = vmatprep.subr.bf16.mxu0 0
        %784 = vmatpush1.bf16.msra.mxu0 0
        %785 = vmatprep.subr.bf16.mxu0 0
        %786 = vmatpush1.bf16.msra.mxu0 0
        %787 = vmatprep.subr.bf16.mxu0 0
        %788 = vmatpush1.bf16.msra.mxu0 0
        %789 = vmatprep.subr.bf16.mxu0 0
        %790 = vmatpush1.bf16.msra.mxu0 0
        %791 = vmatprep.subr.bf16.mxu0 0
        %792 = vmatpush1.bf16.msra.mxu0 0
        %793 = vmatprep.mubr.bf16.mxu0 0
        %794 = vmatmul.mubr.bf16.gmra.mrb[0].mxu0 %v662
        %v795 = vpop.f32.mrb[0].mxu0
        %v796 = vadd.f32 %v674, %v795
        %v797 = vpop.f32.mrb[0].mxu0
        %v798 = vadd.f32 %v678, %v797
        %v799 = vpop.f32.mrb[0].mxu0
        %v800 = vadd.f32 %v674, %v799
        %v801 = vpop.f32.mrb[0].mxu0
        %v802 = vadd.f32 %v678, %v801
        %803 = vmatprep.mubr.bf16.mxu0 0
        %804 = vmatmul.mubr.bf16.gmra.mrb[0].mxu0 %v663
        %v805 = vpop.f32.mrb[0].mxu0
        %v806 = vadd.f32 %v674, %v805
        %v807 = vpop.f32.mrb[0].mxu0
        %v808 = vadd.f32 %v678, %v807
        %v809 = vpop.f32.mrb[0].mxu0
        %v810 = vadd.f32 %v674, %v809
        %v811 = vpop.f32.mrb[0].mxu0
        %v812 = vadd.f32 %v678, %v811
        %813 = vmatprep.mubr.bf16.mxu0 0
        %814 = vmatmul.mubr.bf16.gmra.mrb[0].mxu0 %v664
        %v815 = vpop.f32.mrb[0].mxu0
        %v816 = vadd.f32 %v674, %v815
        %v817 = vpop.f32.mrb[0].mxu0
        %v818 = vadd.f32 %v678, %v817
        %v819 = vpop.f32.mrb[0].mxu0
        %v820 = vadd.f32 %v674, %v819
        %v821 = vpop.f32.mrb[0].mxu0
        %v822 = vadd.f32 %v678, %v821
        %823 = vmatprep.mubr.bf16.mxu0 0
        %824 = vmatmul.mubr.bf16.gmra.mrb[0].mxu0 %v665
        %v825 = vpop.f32.mrb[0].mxu0
        %v826 = vadd.f32 %v674, %v825
        %v827 = vpop.f32.mrb[0].mxu0
        %v828 = vadd.f32 %v678, %v827
        %v829 = vpop.f32.mrb[0].mxu0
        %v830 = vadd.f32 %v674, %v829
        %v831 = vpop.f32.mrb[0].mxu0
        %v832 = vadd.f32 %v678, %v831
        %833 = vmatprep.mubr.bf16.mxu0 0
        %834 = vmatmul.mubr.bf16.gmra.mrb[0].mxu0 %v666
        %v835 = vpop.f32.mrb[0].mxu0
        %v836 = vadd.f32 %v674, %v835
        %v837 = vpop.f32.mrb[0].mxu0
        %v838 = vadd.f32 %v678, %v837
        %v839 = vpop.f32.mrb[0].mxu0
        %v840 = vadd.f32 %v674, %v839
        %v841 = vpop.f32.mrb[0].mxu0
        %v842 = vadd.f32 %v678, %v841
        %843 = vmatprep.mubr.bf16.mxu0 0
        %844 = vmatmul.mubr.bf16.gmra.mrb[0].mxu0 %v667
        %v845 = vpop.f32.mrb[0].mxu0
        %v846 = vadd.f32 %v674, %v845
        %v847 = vpop.f32.mrb[0].mxu0
        %v848 = vadd.f32 %v678, %v847
        %v849 = vpop.f32.mrb[0].mxu0
        %v850 = vadd.f32 %v674, %v849
        %v851 = vpop.f32.mrb[0].mxu0
        %v852 = vadd.f32 %v678, %v851
        %853 = vmatprep.mubr.bf16.mxu0 0
        %854 = vmatmul.mubr.bf16.gmra.mrb[0].mxu0 %v668
        %v855 = vpop.f32.mrb[0].mxu0
        %v856 = vadd.f32 %v674, %v855
        %v857 = vpop.f32.mrb[0].mxu0
        %v858 = vadd.f32 %v678, %v857
        %v859 = vpop.f32.mrb[0].mxu0
        %v860 = vadd.f32 %v674, %v859
        %v861 = vpop.f32.mrb[0].mxu0
        %v862 = vadd.f32 %v678, %v861
        %863 = vmatprep.mubr.bf16.mxu0 0
        %864 = vmatmul.mubr.bf16.gmra.mrb[0].mxu0 %v669
        %v865 = vpop.f32.mrb[0].mxu0
        %v866 = vadd.f32 %v674, %v865
        %v867 = vpop.f32.mrb[0].mxu0
        %v868 = vadd.f32 %v678, %v867
        %v869 = vpop.f32.mrb[0].mxu0
        %v870 = vadd.f32 %v674, %v869
        %v871 = vpop.f32.mrb[0].mxu0
        %v872 = vadd.f32 %v678, %v871
        %873 = vdwg.mxu0
        %v874 = vld [vmem:[%s295] sm:$0xff]
        %v875 = vld [vmem:[%s295 + $0x8] sm:$0xff]
        %v876 = vld [vmem:[%s295 + $0x10] sm:$0xff]
        %v877 = vld [vmem:[%s295 + $0x18] sm:$0xff]
        %v878 = vld [vmem:[%s295 + $0x20] sm:$0xff]
        %v879 = vld [vmem:[%s295 + $0x28] sm:$0xff]
        %v880 = vld [vmem:[%s295 + $0x30] sm:$0xff]
        %v881 = vld [vmem:[%s295 + $0x38] sm:$0xff]
        %v882 = vld [vmem:[%s295 + $0x40] sm:$0xff]
        %v883 = vld [vmem:[%s295 + $0x48] sm:$0xff]
        %v884 = vld [vmem:[%s295 + $0x50] sm:$0xff]
        %v885 = vld [vmem:[%s295 + $0x58] sm:$0xff]
        %v886 = vld [vmem:[%s295 + $0x60] sm:$0xff]
        %v887 = vld [vmem:[%s295 + $0x68] sm:$0xff]
        %v888 = vld [vmem:[%s295 + $0x70] sm:$0xff]
        %v889 = vld [vmem:[%s295 + $0x78] sm:$0xff]
        %v890 = vmul.f32 %v798, 0.5
        %v891 = vmul.f32 %v802, 0.5
        %v892 = vmul.f32 %v808, 0.5
        %v893 = vmul.f32 %v812, 0.5
        %v894 = vmul.f32 %v818, 0.5
        %v895 = vmul.f32 %v822, 0.5
        %v896 = vmul.f32 %v828, 0.5
        %v897 = vmul.f32 %v832, 0.5
        %v898 = vmul.f32 %v838, 0.5
        %v899 = vmul.f32 %v842, 0.5
        %v900 = vmul.f32 %v848, 0.5
        %v901 = vmul.f32 %v852, 0.5
        %v902 = vmul.f32 %v858, 0.5
        %v903 = vmul.f32 %v862, 0.5
        %v904 = vmul.f32 %v868, 0.5
        %v905 = vmul.f32 %v872, 0.5
        %v906 = vmul.f32 %v890, 1.442695
        %v907 = vpow.pop %v906
        %v908 = vmul.f32 %v891, 1.442695
        %v909 = vpow.pop %v908
        %v910 = vmul.f32 %v892, 1.442695
        %v911 = vpow.pop %v910
        %v912 = vmul.f32 %v893, 1.442695
        %v913 = vpow.pop %v912
        %v914 = vmul.f32 %v894, 1.442695
        %v915 = vpow.pop %v914
        %v916 = vmul.f32 %v895, 1.442695
        %v917 = vpow.pop %v916
        %v918 = vmul.f32 %v896, 1.442695
        %v919 = vpow.pop %v918
        %v920 = vmul.f32 %v897, 1.442695
        %v921 = vpow.pop %v920
        %v922 = vmul.f32 %v898, 1.442695
        %v923 = vpow.pop %v922
        %v924 = vmul.f32 %v899, 1.442695
        %v925 = vpow.pop %v924
        %v926 = vmul.f32 %v900, 1.442695
        %v927 = vpow.pop %v926
        %v928 = vmul.f32 %v901, 1.442695
        %v929 = vpow.pop %v928
        %v930 = vmul.f32 %v902, 1.442695
        %v931 = vpow.pop %v930
        %v932 = vmul.f32 %v903, 1.442695
        %v933 = vpow.pop %v932
        %v934 = vmul.f32 %v904, 1.442695
        %v935 = vpow.pop %v934
        %v936 = vmul.f32 %v905, 1.442695
        %v937 = vpow.pop %v936
        %v938 = vmul.f32 %v874, %v907
        %v939 = vmul.f32 %v875, %v909
        %v940 = vmul.f32 %v876, %v911
        %v941 = vmul.f32 %v877, %v913
        %v942 = vmul.f32 %v878, %v915
        %v943 = vmul.f32 %v879, %v917
        %v944 = vmul.f32 %v880, %v919
        %v945 = vmul.f32 %v881, %v921
        %v946 = vmul.f32 %v882, %v923
        %v947 = vmul.f32 %v883, %v925
        %v948 = vmul.f32 %v884, %v927
        %v949 = vmul.f32 %v885, %v929
        %v950 = vmul.f32 %v886, %v931
        %v951 = vmul.f32 %v887, %v933
        %v952 = vmul.f32 %v888, %v935
        %v953 = vmul.f32 %v889, %v937
        %v954 = vadd.f32 %v796, %v938
        %v955 = vadd.f32 %v800, %v939
        %v956 = vadd.f32 %v806, %v940
        %v957 = vadd.f32 %v810, %v941
        %v958 = vadd.f32 %v816, %v942
        %v959 = vadd.f32 %v820, %v943
        %v960 = vadd.f32 %v826, %v944
        %v961 = vadd.f32 %v830, %v945
        %v962 = vadd.f32 %v836, %v946
        %v963 = vadd.f32 %v840, %v947
        %v964 = vadd.f32 %v846, %v948
        %v965 = vadd.f32 %v850, %v949
        %v966 = vadd.f32 %v856, %v950
        %v967 = vadd.f32 %v860, %v951
        %v968 = vadd.f32 %v866, %v952
        %v969 = vadd.f32 %v870, %v953
        %v970 = vld [vmem:[#allocation7 + $0xc] sm:$0xf]
        %v971 = vld [vmem:[#allocation7 + $0x28] sm:$0xf]
        %v972 = vld [vmem:[#allocation7 + $0x44] sm:$0xf]
        %v973 = vld [vmem:[#allocation7 + $0x60] sm:$0xf]
        %v974 = vld [vmem:[#allocation7 + $0x7c] sm:$0xf]
        %v975 = vld [vmem:[#allocation7 + $0x98] sm:$0xf]
        %v976 = vld [vmem:[#allocation7 + $0xb4] sm:$0xf]
        %v977 = vld [vmem:[#allocation7 + $0xd0] sm:$0xf]
        %v978 = vld [vmem:[#allocation7 + $0xec] sm:$0xf]
        %v979 = vld [vmem:[#allocation7 + $0x108] sm:$0xf]
        %v980 = vld [vmem:[#allocation7 + $0x124] sm:$0xf]
        %v981 = vld [vmem:[#allocation7 + $0x140] sm:$0xf]
        %v982 = vld [vmem:[#allocation7 + $0x15c] sm:$0xf]
        %v983 = vld [vmem:[#allocation7 + $0x178] sm:$0xf]
        %v984 = vld [vmem:[#allocation7 + $0x194] sm:$0xf]
        %v985 = vld [vmem:[#allocation7 + $0x1b0] sm:$0xf]
        %v986 = vld [vmem:[%s3 + $0x3] sm:$0x1]
        %v987 = vpack.c.bf16 %v955, %v954
        %v988 = vpack.c.bf16 %v957, %v956
        %v989 = vpack.c.bf16 %v959, %v958
        %v990 = vpack.c.bf16 %v961, %v960
        %v991 = vpack.c.bf16 %v963, %v962
        %v992 = vpack.c.bf16 %v965, %v964
        %v993 = vpack.c.bf16 %v967, %v966
        %v994 = vpack.c.bf16 %v969, %v968
        %v996 = vlaneseq
        %v997 = vshrl.u32 %v996, 7
        %v998 = vsub.s32 0, %v997
        %v999 = vrot.slane %v986, %v998
        %v1017 = vunpack.c.l.b16 %v970
        %v1018 = vunpack.c.l.b16 %v971
        %v1019 = vunpack.c.l.b16 %v972
        %v1020 = vunpack.c.l.b16 %v973
        %v1021 = vunpack.c.l.b16 %v974
        %v1022 = vunpack.c.l.b16 %v975
        %v1023 = vunpack.c.l.b16 %v976
        %v1024 = vunpack.c.l.b16 %v977
        %v1025 = vunpack.c.l.b16 %v978
        %v1026 = vunpack.c.l.b16 %v979
        %v1027 = vunpack.c.l.b16 %v980
        %v1028 = vunpack.c.l.b16 %v981
        %v1029 = vunpack.c.l.b16 %v982
        %v1030 = vunpack.c.l.b16 %v983
        %v1031 = vunpack.c.l.b16 %v984
        %v1032 = vunpack.c.l.b16 %v985
        %v1033 = vpack.c.b16 %v1018, %v1017
        %v1034 = vpack.c.b16 %v1020, %v1019
        %v1035 = vpack.c.b16 %v1022, %v1021
        %v1036 = vpack.c.b16 %v1024, %v1023
        %v1037 = vpack.c.b16 %v1026, %v1025
        %v1038 = vpack.c.b16 %v1028, %v1027
        %v1039 = vpack.c.b16 %v1030, %v1029
        %v1040 = vpack.c.b16 %v1032, %v1031
        %1049 = vmatprep.subr.bf16.mxu0 0
        %1050 = vmatpush1.bf16.msra.mxu0 %v1033
        %1051 = vmatprep.subr.bf16.mxu0 0
        %1052 = vmatpush1.bf16.msra.mxu0 %v1034
        %1053 = vmatprep.subr.bf16.mxu0 0
        %1054 = vmatpush1.bf16.msra.mxu0 %v1035
        %1055 = vmatprep.subr.bf16.mxu0 0
        %1056 = vmatpush1.bf16.msra.mxu0 %v1036
        %1057 = vmatprep.subr.bf16.mxu0 0
        %1058 = vmatpush1.bf16.msra.mxu0 %v1037
        %1059 = vmatprep.subr.bf16.mxu0 0
        %1060 = vmatpush1.bf16.msra.mxu0 %v1038
        %1061 = vmatprep.subr.bf16.mxu0 0
        %1062 = vmatpush1.bf16.msra.mxu0 %v1039
        %1063 = vmatprep.subr.bf16.mxu0 0
        %1064 = vmatpush1.bf16.msra.mxu0 %v1040
        %1065 = vmatprep.subr.bf16.mxu0 0
        %1066 = vmatpush1.bf16.msra.mxu0 0
        %1067 = vmatprep.subr.bf16.mxu0 0
        %1068 = vmatpush1.bf16.msra.mxu0 0
        %1069 = vmatprep.subr.bf16.mxu0 0
        %1070 = vmatpush1.bf16.msra.mxu0 0
        %1071 = vmatprep.subr.bf16.mxu0 0
        %1072 = vmatpush1.bf16.msra.mxu0 0
        %1073 = vmatprep.subr.bf16.mxu0 0
        %1074 = vmatpush1.bf16.msra.mxu0 0
        %1075 = vmatprep.subr.bf16.mxu0 0
        %1076 = vmatpush1.bf16.msra.mxu0 0
        %1077 = vmatprep.subr.bf16.mxu0 0
        %1078 = vmatpush1.bf16.msra.mxu0 0
        %1079 = vmatprep.subr.bf16.mxu0 0
        %1080 = vmatpush1.bf16.msra.mxu0 0
        %1081 = vmatprep.mubr.bf16.mxu0 0
        %1082 = vmatmul.mubr.bf16.gmra.mrb[0].mxu0 %v987
        %v1083 = vpop.f32.mrb[0].mxu0
        %v1084 = vadd.f32 %v999, %v1083
        %v1085 = vpop.f32.mrb[0].mxu0
        %v1086 = vpop.f32.mrb[0].mxu0
        %v1087 = vadd.f32 %v999, %v1086
        %v1088 = vpop.f32.mrb[0].mxu0
        %1089 = vmatprep.mubr.bf16.mxu0 0
        %1090 = vmatmul.mubr.bf16.gmra.mrb[0].mxu0 %v988
        %v1091 = vpop.f32.mrb[0].mxu0
        %v1092 = vadd.f32 %v999, %v1091
        %v1093 = vpop.f32.mrb[0].mxu0
        %v1094 = vpop.f32.mrb[0].mxu0
        %v1095 = vadd.f32 %v999, %v1094
        %v1096 = vpop.f32.mrb[0].mxu0
        %1097 = vmatprep.mubr.bf16.mxu0 0
        %1098 = vmatmul.mubr.bf16.gmra.mrb[0].mxu0 %v989
        %v1099 = vpop.f32.mrb[0].mxu0
        %v1100 = vadd.f32 %v999, %v1099
        %v1101 = vpop.f32.mrb[0].mxu0
        %v1102 = vpop.f32.mrb[0].mxu0
        %v1103 = vadd.f32 %v999, %v1102
        %v1104 = vpop.f32.mrb[0].mxu0
        %1105 = vmatprep.mubr.bf16.mxu0 0
        %1106 = vmatmul.mubr.bf16.gmra.mrb[0].mxu0 %v990
        %v1107 = vpop.f32.mrb[0].mxu0
        %v1108 = vadd.f32 %v999, %v1107
        %v1109 = vpop.f32.mrb[0].mxu0
        %v1110 = vpop.f32.mrb[0].mxu0
        %v1111 = vadd.f32 %v999, %v1110
        %v1112 = vpop.f32.mrb[0].mxu0
        %1113 = vmatprep.mubr.bf16.mxu0 0
        %1114 = vmatmul.mubr.bf16.gmra.mrb[0].mxu0 %v991
        %v1115 = vpop.f32.mrb[0].mxu0
        %v1116 = vadd.f32 %v999, %v1115
        %v1117 = vpop.f32.mrb[0].mxu0
        %v1118 = vpop.f32.mrb[0].mxu0
        %v1119 = vadd.f32 %v999, %v1118
        %v1120 = vpop.f32.mrb[0].mxu0
        %1121 = vmatprep.mubr.bf16.mxu0 0
        %1122 = vmatmul.mubr.bf16.gmra.mrb[0].mxu0 %v992
        %v1123 = vpop.f32.mrb[0].mxu0
        %v1124 = vadd.f32 %v999, %v1123
        %v1125 = vpop.f32.mrb[0].mxu0
        %v1126 = vpop.f32.mrb[0].mxu0
        %v1127 = vadd.f32 %v999, %v1126
        %v1128 = vpop.f32.mrb[0].mxu0
        %1129 = vmatprep.mubr.bf16.mxu0 0
        %1130 = vmatmul.mubr.bf16.gmra.mrb[0].mxu0 %v993
        %v1131 = vpop.f32.mrb[0].mxu0
        %v1132 = vadd.f32 %v999, %v1131
        %v1133 = vpop.f32.mrb[0].mxu0
        %v1134 = vpop.f32.mrb[0].mxu0
        %v1135 = vadd.f32 %v999, %v1134
        %v1136 = vpop.f32.mrb[0].mxu0
        %1137 = vmatprep.mubr.bf16.mxu0 0
        %1138 = vmatmul.mubr.bf16.gmra.mrb[0].mxu0 %v994
        %v1139 = vpop.f32.mrb[0].mxu0
        %v1140 = vadd.f32 %v999, %v1139
        %v1141 = vpop.f32.mrb[0].mxu0
        %v1142 = vpop.f32.mrb[0].mxu0
        %v1143 = vadd.f32 %v999, %v1142
        %v1144 = vpop.f32.mrb[0].mxu0
        %1145 = vdwg.mxu0
        %v1146 = vld [vmem:[#allocation7 + $0x10] sm:$0xf]
        %v1147 = vld [vmem:[#allocation7 + $0x2c] sm:$0xf]
        %v1148 = vld [vmem:[#allocation7 + $0x48] sm:$0xf]
        %v1149 = vld [vmem:[#allocation7 + $0x64] sm:$0xf]
        %v1150 = vld [vmem:[#allocation7 + $0x80] sm:$0xf]
        %v1151 = vld [vmem:[#allocation7 + $0x9c] sm:$0xf]
        %v1152 = vld [vmem:[#allocation7 + $0xb8] sm:$0xf]
        %v1153 = vld [vmem:[#allocation7 + $0xd4] sm:$0xf]
        %v1154 = vld [vmem:[#allocation7 + $0xf0] sm:$0xf]
        %v1155 = vld [vmem:[#allocation7 + $0x10c] sm:$0xf]
        %v1156 = vld [vmem:[#allocation7 + $0x128] sm:$0xf]
        %v1157 = vld [vmem:[#allocation7 + $0x144] sm:$0xf]
        %v1158 = vld [vmem:[#allocation7 + $0x160] sm:$0xf]
        %v1159 = vld [vmem:[#allocation7 + $0x17c] sm:$0xf]
        %v1160 = vld [vmem:[#allocation7 + $0x198] sm:$0xf]
        %v1161 = vld [vmem:[#allocation7 + $0x1b4] sm:$0xf]
        %v1162 = vld [vmem:[%s3 + $0x4] sm:$0x1]
        %v1163 = vpack.c.bf16 %v1087, %v1084
        %v1164 = vpack.c.bf16 %v1095, %v1092
        %v1165 = vpack.c.bf16 %v1103, %v1100
        %v1166 = vpack.c.bf16 %v1111, %v1108
        %v1167 = vpack.c.bf16 %v1119, %v1116
        %v1168 = vpack.c.bf16 %v1127, %v1124
        %v1169 = vpack.c.bf16 %v1135, %v1132
        %v1170 = vpack.c.bf16 %v1143, %v1140
        %v1172 = vlaneseq
        %v1173 = vshrl.u32 %v1172, 7
        %v1174 = vsub.s32 0, %v1173
        %v1175 = vrot.slane %v1162, %v1174
        %v1193 = vunpack.c.l.b16 %v1146
        %v1194 = vunpack.c.l.b16 %v1147
        %v1195 = vunpack.c.l.b16 %v1148
        %v1196 = vunpack.c.l.b16 %v1149
        %v1197 = vunpack.c.l.b16 %v1150
        %v1198 = vunpack.c.l.b16 %v1151
        %v1199 = vunpack.c.l.b16 %v1152
        %v1200 = vunpack.c.l.b16 %v1153
        %v1201 = vunpack.c.l.b16 %v1154
        %v1202 = vunpack.c.l.b16 %v1155
        %v1203 = vunpack.c.l.b16 %v1156
        %v1204 = vunpack.c.l.b16 %v1157
        %v1205 = vunpack.c.l.b16 %v1158
        %v1206 = vunpack.c.l.b16 %v1159
        %v1207 = vunpack.c.l.b16 %v1160
        %v1208 = vunpack.c.l.b16 %v1161
        %v1209 = vpack.c.b16 %v1194, %v1193
        %v1210 = vpack.c.b16 %v1196, %v1195
        %v1211 = vpack.c.b16 %v1198, %v1197
        %v1212 = vpack.c.b16 %v1200, %v1199
        %v1213 = vpack.c.b16 %v1202, %v1201
        %v1214 = vpack.c.b16 %v1204, %v1203
        %v1215 = vpack.c.b16 %v1206, %v1205
        %v1216 = vpack.c.b16 %v1208, %v1207
        %1225 = vmatprep.subr.bf16.mxu0 0
        %1226 = vmatpush1.bf16.msra.mxu0 %v1209
        %1227 = vmatprep.subr.bf16.mxu0 0
        %1228 = vmatpush1.bf16.msra.mxu0 %v1210
        %1229 = vmatprep.subr.bf16.mxu0 0
        %1230 = vmatpush1.bf16.msra.mxu0 %v1211
        %1231 = vmatprep.subr.bf16.mxu0 0
        %1232 = vmatpush1.bf16.msra.mxu0 %v1212
        %1233 = vmatprep.subr.bf16.mxu0 0
        %1234 = vmatpush1.bf16.msra.mxu0 %v1213
        %1235 = vmatprep.subr.bf16.mxu0 0
        %1236 = vmatpush1.bf16.msra.mxu0 %v1214
        %1237 = vmatprep.subr.bf16.mxu0 0
        %1238 = vmatpush1.bf16.msra.mxu0 %v1215
        %1239 = vmatprep.subr.bf16.mxu0 0
        %1240 = vmatpush1.bf16.msra.mxu0 %v1216
        %1241 = vmatprep.subr.bf16.mxu0 0
        %1242 = vmatpush1.bf16.msra.mxu0 0
        %1243 = vmatprep.subr.bf16.mxu0 0
        %1244 = vmatpush1.bf16.msra.mxu0 0
        %1245 = vmatprep.subr.bf16.mxu0 0
        %1246 = vmatpush1.bf16.msra.mxu0 0
        %1247 = vmatprep.subr.bf16.mxu0 0
        %1248 = vmatpush1.bf16.msra.mxu0 0
        %1249 = vmatprep.subr.bf16.mxu0 0
        %1250 = vmatpush1.bf16.msra.mxu0 0
        %1251 = vmatprep.subr.bf16.mxu0 0
        %1252 = vmatpush1.bf16.msra.mxu0 0
        %1253 = vmatprep.subr.bf16.mxu0 0
        %1254 = vmatpush1.bf16.msra.mxu0 0
        %1255 = vmatprep.subr.bf16.mxu0 0
        %1256 = vmatpush1.bf16.msra.mxu0 0
        %1257 = vmatprep.mubr.bf16.mxu0 0
        %1258 = vmatmul.mubr.bf16.gmra.mrb[0].mxu0 %v1163
        %v1259 = vpop.f32.mrb[0].mxu0
        %v1260 = vadd.f32 %v1175, %v1259
        %v1261 = vpop.f32.mrb[0].mxu0
        %v1262 = vpop.f32.mrb[0].mxu0
        %v1263 = vadd.f32 %v1175, %v1262
        %v1264 = vpop.f32.mrb[0].mxu0
        %1265 = vmatprep.mubr.bf16.mxu0 0
        %1266 = vmatmul.mubr.bf16.gmra.mrb[0].mxu0 %v1164
        %v1267 = vpop.f32.mrb[0].mxu0
        %v1268 = vadd.f32 %v1175, %v1267
        %v1269 = vpop.f32.mrb[0].mxu0
        %v1270 = vpop.f32.mrb[0].mxu0
        %v1271 = vadd.f32 %v1175, %v1270
        %v1272 = vpop.f32.mrb[0].mxu0
        %1273 = vmatprep.mubr.bf16.mxu0 0
        %1274 = vmatmul.mubr.bf16.gmra.mrb[0].mxu0 %v1165
        %v1275 = vpop.f32.mrb[0].mxu0
        %v1276 = vadd.f32 %v1175, %v1275
        %v1277 = vpop.f32.mrb[0].mxu0
        %v1278 = vpop.f32.mrb[0].mxu0
        %v1279 = vadd.f32 %v1175, %v1278
        %v1280 = vpop.f32.mrb[0].mxu0
        %1281 = vmatprep.mubr.bf16.mxu0 0
        %1282 = vmatmul.mubr.bf16.gmra.mrb[0].mxu0 %v1166
        %v1283 = vpop.f32.mrb[0].mxu0
        %v1284 = vadd.f32 %v1175, %v1283
        %v1285 = vpop.f32.mrb[0].mxu0
        %v1286 = vpop.f32.mrb[0].mxu0
        %v1287 = vadd.f32 %v1175, %v1286
        %v1288 = vpop.f32.mrb[0].mxu0
        %1289 = vmatprep.mubr.bf16.mxu0 0
        %1290 = vmatmul.mubr.bf16.gmra.mrb[0].mxu0 %v1167
        %v1291 = vpop.f32.mrb[0].mxu0
        %v1292 = vadd.f32 %v1175, %v1291
        %v1293 = vpop.f32.mrb[0].mxu0
        %v1294 = vpop.f32.mrb[0].mxu0
        %v1295 = vadd.f32 %v1175, %v1294
        %v1296 = vpop.f32.mrb[0].mxu0
        %1297 = vmatprep.mubr.bf16.mxu0 0
        %1298 = vmatmul.mubr.bf16.gmra.mrb[0].mxu0 %v1168
        %v1299 = vpop.f32.mrb[0].mxu0
        %v1300 = vadd.f32 %v1175, %v1299
        %v1301 = vpop.f32.mrb[0].mxu0
        %v1302 = vpop.f32.mrb[0].mxu0
        %v1303 = vadd.f32 %v1175, %v1302
        %v1304 = vpop.f32.mrb[0].mxu0
        %1305 = vmatprep.mubr.bf16.mxu0 0
        %1306 = vmatmul.mubr.bf16.gmra.mrb[0].mxu0 %v1169
        %v1307 = vpop.f32.mrb[0].mxu0
        %v1308 = vadd.f32 %v1175, %v1307
        %v1309 = vpop.f32.mrb[0].mxu0
        %v1310 = vpop.f32.mrb[0].mxu0
        %v1311 = vadd.f32 %v1175, %v1310
        %v1312 = vpop.f32.mrb[0].mxu0
        %1313 = vmatprep.mubr.bf16.mxu0 0
        %1314 = vmatmul.mubr.bf16.gmra.mrb[0].mxu0 %v1170
        %v1315 = vpop.f32.mrb[0].mxu0
        %v1316 = vadd.f32 %v1175, %v1315
        %v1317 = vpop.f32.mrb[0].mxu0
        %v1318 = vpop.f32.mrb[0].mxu0
        %v1319 = vadd.f32 %v1175, %v1318
        %v1320 = vpop.f32.mrb[0].mxu0
        %1321 = vdwg.mxu0
        %v1322 = vmax.f32 %v1260, 0.0
        %v1323 = vmax.f32 %v1263, 0.0
        %v1324 = vmax.f32 %v1268, 0.0
        %v1325 = vmax.f32 %v1271, 0.0
        %v1326 = vmax.f32 %v1276, 0.0
        %v1327 = vmax.f32 %v1279, 0.0
        %v1328 = vmax.f32 %v1284, 0.0
        %v1329 = vmax.f32 %v1287, 0.0
        %v1330 = vmax.f32 %v1292, 0.0
        %v1331 = vmax.f32 %v1295, 0.0
        %v1332 = vmax.f32 %v1300, 0.0
        %v1333 = vmax.f32 %v1303, 0.0
        %v1334 = vmax.f32 %v1308, 0.0
        %v1335 = vmax.f32 %v1311, 0.0
        %v1336 = vmax.f32 %v1316, 0.0
        %v1337 = vmax.f32 %v1319, 0.0
        %v1338 = vld [vmem:[#allocation7 + $0x14] sm:$0xff]
        %v1339 = vld [vmem:[#allocation7 + $0x30] sm:$0xff]
        %v1340 = vld [vmem:[#allocation7 + $0x4c] sm:$0xff]
        %v1341 = vld [vmem:[#allocation7 + $0x68] sm:$0xff]
        %v1342 = vld [vmem:[#allocation7 + $0x84] sm:$0xff]
        %v1343 = vld [vmem:[#allocation7 + $0xa0] sm:$0xff]
        %v1344 = vld [vmem:[#allocation7 + $0xbc] sm:$0xff]
        %v1345 = vld [vmem:[#allocation7 + $0xd8] sm:$0xff]
        %v1346 = vld [vmem:[#allocation7 + $0xf4] sm:$0xff]
        %v1347 = vld [vmem:[#allocation7 + $0x110] sm:$0xff]
        %v1348 = vld [vmem:[#allocation7 + $0x12c] sm:$0xff]
        %v1349 = vld [vmem:[#allocation7 + $0x148] sm:$0xff]
        %v1350 = vld [vmem:[#allocation7 + $0x164] sm:$0xff]
        %v1351 = vld [vmem:[#allocation7 + $0x180] sm:$0xff]
        %v1352 = vld [vmem:[#allocation7 + $0x19c] sm:$0xff]
        %v1353 = vld [vmem:[#allocation7 + $0x1b8] sm:$0xff]
        %v1354 = vld [vmem:[%s3 + $0x5] sm:$0x3]
        %v1355 = vpack.c.bf16 %v1323, %v1322
        %v1356 = vpack.c.bf16 %v1325, %v1324
        %v1357 = vpack.c.bf16 %v1327, %v1326
        %v1358 = vpack.c.bf16 %v1329, %v1328
        %v1359 = vpack.c.bf16 %v1331, %v1330
        %v1360 = vpack.c.bf16 %v1333, %v1332
        %v1361 = vpack.c.bf16 %v1335, %v1334
        %v1362 = vpack.c.bf16 %v1337, %v1336
        %v1364 = vlaneseq
        %v1365 = vshrl.u32 %v1364, 7
        %v1366 = vsub.s32 0, %v1365
        %v1367 = vrot.slane %v1354, %v1366
        %v1368 = vlaneseq
        %v1369 = vshrl.u32 %v1368, 7
        %v1370 = vsub.s32 1, %v1369
        %v1371 = vrot.slane %v1354, %v1370
        %v1390 = vunpack.c.l.b16 %v1338
        %v1391 = vunpack.c.h.b16 %v1338
        %v1392 = vunpack.c.l.b16 %v1339
        %v1393 = vunpack.c.h.b16 %v1339
        %v1394 = vunpack.c.l.b16 %v1340
        %v1395 = vunpack.c.h.b16 %v1340
        %v1396 = vunpack.c.l.b16 %v1341
        %v1397 = vunpack.c.h.b16 %v1341
        %v1398 = vunpack.c.l.b16 %v1342
        %v1399 = vunpack.c.h.b16 %v1342
        %v1400 = vunpack.c.l.b16 %v1343
        %v1401 = vunpack.c.h.b16 %v1343
        %v1402 = vunpack.c.l.b16 %v1344
        %v1403 = vunpack.c.h.b16 %v1344
        %v1404 = vunpack.c.l.b16 %v1345
        %v1405 = vunpack.c.h.b16 %v1345
        %v1406 = vunpack.c.l.b16 %v1346
        %v1407 = vunpack.c.h.b16 %v1346
        %v1408 = vunpack.c.l.b16 %v1347
        %v1409 = vunpack.c.h.b16 %v1347
        %v1410 = vunpack.c.l.b16 %v1348
        %v1411 = vunpack.c.h.b16 %v1348
        %v1412 = vunpack.c.l.b16 %v1349
        %v1413 = vunpack.c.h.b16 %v1349
        %v1414 = vunpack.c.l.b16 %v1350
        %v1415 = vunpack.c.h.b16 %v1350
        %v1416 = vunpack.c.l.b16 %v1351
        %v1417 = vunpack.c.h.b16 %v1351
        %v1418 = vunpack.c.l.b16 %v1352
        %v1419 = vunpack.c.h.b16 %v1352
        %v1420 = vunpack.c.l.b16 %v1353
        %v1421 = vunpack.c.h.b16 %v1353
        %v1422 = vpack.c.b16 %v1392, %v1390
        %v1423 = vpack.c.b16 %v1393, %v1391
        %v1424 = vpack.c.b16 %v1396, %v1394
        %v1425 = vpack.c.b16 %v1397, %v1395
        %v1426 = vpack.c.b16 %v1400, %v1398
        %v1427 = vpack.c.b16 %v1401, %v1399
        %v1428 = vpack.c.b16 %v1404, %v1402
        %v1429 = vpack.c.b16 %v1405, %v1403
        %v1430 = vpack.c.b16 %v1408, %v1406
        %v1431 = vpack.c.b16 %v1409, %v1407
        %v1432 = vpack.c.b16 %v1412, %v1410
        %v1433 = vpack.c.b16 %v1413, %v1411
        %v1434 = vpack.c.b16 %v1416, %v1414
        %v1435 = vpack.c.b16 %v1417, %v1415
        %v1436 = vpack.c.b16 %v1420, %v1418
        %v1437 = vpack.c.b16 %v1421, %v1419
        %1454 = vmatprep.subr.bf16.mxu0 %v1423
        %1455 = vmatpush1.bf16.msra.mxu0 %v1422
        %1456 = vmatprep.subr.bf16.mxu0 %v1425
        %1457 = vmatpush1.bf16.msra.mxu0 %v1424
        %1458 = vmatprep.subr.bf16.mxu0 %v1427
        %1459 = vmatpush1.bf16.msra.mxu0 %v1426
        %1460 = vmatprep.subr.bf16.mxu0 %v1429
        %1461 = vmatpush1.bf16.msra.mxu0 %v1428
        %1462 = vmatprep.subr.bf16.mxu0 %v1431
        %1463 = vmatpush1.bf16.msra.mxu0 %v1430
        %1464 = vmatprep.subr.bf16.mxu0 %v1433
        %1465 = vmatpush1.bf16.msra.mxu0 %v1432
        %1466 = vmatprep.subr.bf16.mxu0 %v1435
        %1467 = vmatpush1.bf16.msra.mxu0 %v1434
        %1468 = vmatprep.subr.bf16.mxu0 %v1437
        %1469 = vmatpush1.bf16.msra.mxu0 %v1436
        %1470 = vmatprep.subr.bf16.mxu0 0
        %1471 = vmatpush1.bf16.msra.mxu0 0
        %1472 = vmatprep.subr.bf16.mxu0 0
        %1473 = vmatpush1.bf16.msra.mxu0 0
        %1474 = vmatprep.subr.bf16.mxu0 0
        %1475 = vmatpush1.bf16.msra.mxu0 0
        %1476 = vmatprep.subr.bf16.mxu0 0
        %1477 = vmatpush1.bf16.msra.mxu0 0
        %1478 = vmatprep.subr.bf16.mxu0 0
        %1479 = vmatpush1.bf16.msra.mxu0 0
        %1480 = vmatprep.subr.bf16.mxu0 0
        %1481 = vmatpush1.bf16.msra.mxu0 0
        %1482 = vmatprep.subr.bf16.mxu0 0
        %1483 = vmatpush1.bf16.msra.mxu0 0
        %1484 = vmatprep.subr.bf16.mxu0 0
        %1485 = vmatpush1.bf16.msra.mxu0 0
        %1486 = vmatprep.mubr.bf16.mxu0 0
        %1487 = vmatmul.mubr.bf16.gmra.mrb[0].mxu0 %v1355
        %v1488 = vpop.f32.mrb[0].mxu0
        %v1489 = vadd.f32 %v1367, %v1488
        %v1490 = vpop.f32.mrb[0].mxu0
        %v1491 = vadd.f32 %v1371, %v1490
        %v1492 = vpop.f32.mrb[0].mxu0
        %v1493 = vadd.f32 %v1367, %v1492
        %v1494 = vpop.f32.mrb[0].mxu0
        %v1495 = vadd.f32 %v1371, %v1494
        %1496 = vmatprep.mubr.bf16.mxu0 0
        %1497 = vmatmul.mubr.bf16.gmra.mrb[0].mxu0 %v1356
        %v1498 = vpop.f32.mrb[0].mxu0
        %v1499 = vadd.f32 %v1367, %v1498
        %v1500 = vpop.f32.mrb[0].mxu0
        %v1501 = vadd.f32 %v1371, %v1500
        %v1502 = vpop.f32.mrb[0].mxu0
        %v1503 = vadd.f32 %v1367, %v1502
        %v1504 = vpop.f32.mrb[0].mxu0
        %v1505 = vadd.f32 %v1371, %v1504
        %1506 = vmatprep.mubr.bf16.mxu0 0
        %1507 = vmatmul.mubr.bf16.gmra.mrb[0].mxu0 %v1357
        %v1508 = vpop.f32.mrb[0].mxu0
        %v1509 = vadd.f32 %v1367, %v1508
        %v1510 = vpop.f32.mrb[0].mxu0
        %v1511 = vadd.f32 %v1371, %v1510
        %v1512 = vpop.f32.mrb[0].mxu0
        %v1513 = vadd.f32 %v1367, %v1512
        %v1514 = vpop.f32.mrb[0].mxu0
        %v1515 = vadd.f32 %v1371, %v1514
        %1516 = vmatprep.mubr.bf16.mxu0 0
        %1517 = vmatmul.mubr.bf16.gmra.mrb[0].mxu0 %v1358
        %v1518 = vpop.f32.mrb[0].mxu0
        %v1519 = vadd.f32 %v1367, %v1518
        %v1520 = vpop.f32.mrb[0].mxu0
        %v1521 = vadd.f32 %v1371, %v1520
        %v1522 = vpop.f32.mrb[0].mxu0
        %v1523 = vadd.f32 %v1367, %v1522
        %v1524 = vpop.f32.mrb[0].mxu0
        %v1525 = vadd.f32 %v1371, %v1524
        %1526 = vmatprep.mubr.bf16.mxu0 0
        %1527 = vmatmul.mubr.bf16.gmra.mrb[0].mxu0 %v1359
        %v1528 = vpop.f32.mrb[0].mxu0
        %v1529 = vadd.f32 %v1367, %v1528
        %v1530 = vpop.f32.mrb[0].mxu0
        %v1531 = vadd.f32 %v1371, %v1530
        %v1532 = vpop.f32.mrb[0].mxu0
        %v1533 = vadd.f32 %v1367, %v1532
        %v1534 = vpop.f32.mrb[0].mxu0
        %v1535 = vadd.f32 %v1371, %v1534
        %1536 = vmatprep.mubr.bf16.mxu0 0
        %1537 = vmatmul.mubr.bf16.gmra.mrb[0].mxu0 %v1360
        %v1538 = vpop.f32.mrb[0].mxu0
        %v1539 = vadd.f32 %v1367, %v1538
        %v1540 = vpop.f32.mrb[0].mxu0
        %v1541 = vadd.f32 %v1371, %v1540
        %v1542 = vpop.f32.mrb[0].mxu0
        %v1543 = vadd.f32 %v1367, %v1542
        %v1544 = vpop.f32.mrb[0].mxu0
        %v1545 = vadd.f32 %v1371, %v1544
        %1546 = vmatprep.mubr.bf16.mxu0 0
        %1547 = vmatmul.mubr.bf16.gmra.mrb[0].mxu0 %v1361
        %v1548 = vpop.f32.mrb[0].mxu0
        %v1549 = vadd.f32 %v1367, %v1548
        %v1550 = vpop.f32.mrb[0].mxu0
        %v1551 = vadd.f32 %v1371, %v1550
        %v1552 = vpop.f32.mrb[0].mxu0
        %v1553 = vadd.f32 %v1367, %v1552
        %v1554 = vpop.f32.mrb[0].mxu0
        %v1555 = vadd.f32 %v1371, %v1554
        %1556 = vmatprep.mubr.bf16.mxu0 0
        %1557 = vmatmul.mubr.bf16.gmra.mrb[0].mxu0 %v1362
        %v1558 = vpop.f32.mrb[0].mxu0
        %v1559 = vadd.f32 %v1367, %v1558
        %v1560 = vpop.f32.mrb[0].mxu0
        %v1561 = vadd.f32 %v1371, %v1560
        %v1562 = vpop.f32.mrb[0].mxu0
        %v1563 = vadd.f32 %v1367, %v1562
        %v1564 = vpop.f32.mrb[0].mxu0
        %v1565 = vadd.f32 %v1371, %v1564
        %1566 = vdwg.mxu0
        %1567 = vst [vmem:[%s328] sm:$0xff] %v1489
        %1568 = vst [vmem:[%s328 + $0x8] sm:$0xff] %v1491
        %1569 = vst [vmem:[%s328 + $0x10] sm:$0xff] %v1493
        %1570 = vst [vmem:[%s328 + $0x18] sm:$0xff] %v1495
        %1571 = vst [vmem:[%s328 + $0x20] sm:$0xff] %v1499
        %1572 = vst [vmem:[%s328 + $0x28] sm:$0xff] %v1501
        %1573 = vst [vmem:[%s328 + $0x30] sm:$0xff] %v1503
        %1574 = vst [vmem:[%s328 + $0x38] sm:$0xff] %v1505
        %1575 = vst [vmem:[%s328 + $0x40] sm:$0xff] %v1509
        %1576 = vst [vmem:[%s328 + $0x48] sm:$0xff] %v1511
        %1577 = vst [vmem:[%s328 + $0x50] sm:$0xff] %v1513
        %1578 = vst [vmem:[%s328 + $0x58] sm:$0xff] %v1515
        %1579 = vst [vmem:[%s328 + $0x60] sm:$0xff] %v1519
        %1580 = vst [vmem:[%s328 + $0x68] sm:$0xff] %v1521
        %1581 = vst [vmem:[%s328 + $0x70] sm:$0xff] %v1523
        %1582 = vst [vmem:[%s328 + $0x78] sm:$0xff] %v1525
        %1583 = vst [vmem:[%s328 + $0x80] sm:$0xff] %v1529
        %1584 = vst [vmem:[%s328 + $0x88] sm:$0xff] %v1531
        %1585 = vst [vmem:[%s328 + $0x90] sm:$0xff] %v1533
        %1586 = vst [vmem:[%s328 + $0x98] sm:$0xff] %v1535
        %1587 = vst [vmem:[%s328 + $0xa0] sm:$0xff] %v1539
        %1588 = vst [vmem:[%s328 + $0xa8] sm:$0xff] %v1541
        %1589 = vst [vmem:[%s328 + $0xb0] sm:$0xff] %v1543
        %1590 = vst [vmem:[%s328 + $0xb8] sm:$0xff] %v1545
        %1591 = vst [vmem:[%s328 + $0xc0] sm:$0xff] %v1549
        %1592 = vst [vmem:[%s328 + $0xc8] sm:$0xff] %v1551
        %1593 = vst [vmem:[%s328 + $0xd0] sm:$0xff] %v1553
        %1594 = vst [vmem:[%s328 + $0xd8] sm:$0xff] %v1555
        %1595 = vst [vmem:[%s328 + $0xe0] sm:$0xff] %v1559
        %1596 = vst [vmem:[%s328 + $0xe8] sm:$0xff] %v1561
        %1597 = vst [vmem:[%s328 + $0xf0] sm:$0xff] %v1563
        %1598 = vst [vmem:[%s328 + $0xf8] sm:$0xff] %v1565
        %1599 = vst [vmem:[%s335] sm:$0xff] %v796
        %1600 = vst [vmem:[%s335 + $0x8] sm:$0xff] %v800
        %1601 = vst [vmem:[%s335 + $0x10] sm:$0xff] %v806
        %1602 = vst [vmem:[%s335 + $0x18] sm:$0xff] %v810
        %1603 = vst [vmem:[%s335 + $0x20] sm:$0xff] %v816
        %1604 = vst [vmem:[%s335 + $0x28] sm:$0xff] %v820
        %1605 = vst [vmem:[%s335 + $0x30] sm:$0xff] %v826
        %1606 = vst [vmem:[%s335 + $0x38] sm:$0xff] %v830
        %1607 = vst [vmem:[%s335 + $0x40] sm:$0xff] %v836
        %1608 = vst [vmem:[%s335 + $0x48] sm:$0xff] %v840
        %1609 = vst [vmem:[%s335 + $0x50] sm:$0xff] %v846
        %1610 = vst [vmem:[%s335 + $0x58] sm:$0xff] %v850
        %1611 = vst [vmem:[%s335 + $0x60] sm:$0xff] %v856
        %1612 = vst [vmem:[%s335 + $0x68] sm:$0xff] %v860
        %1613 = vst [vmem:[%s335 + $0x70] sm:$0xff] %v866
        %1614 = vst [vmem:[%s335 + $0x78] sm:$0xff] %v870
        %1615 = vst [vmem:[%s342] sm:$0xff] %v798
        %1616 = vst [vmem:[%s342 + $0x8] sm:$0xff] %v802
        %1617 = vst [vmem:[%s342 + $0x10] sm:$0xff] %v808
        %1618 = vst [vmem:[%s342 + $0x18] sm:$0xff] %v812
        %1619 = vst [vmem:[%s342 + $0x20] sm:$0xff] %v818
        %1620 = vst [vmem:[%s342 + $0x28] sm:$0xff] %v822
        %1621 = vst [vmem:[%s342 + $0x30] sm:$0xff] %v828
        %1622 = vst [vmem:[%s342 + $0x38] sm:$0xff] %v832
        %1623 = vst [vmem:[%s342 + $0x40] sm:$0xff] %v838
        %1624 = vst [vmem:[%s342 + $0x48] sm:$0xff] %v842
        %1625 = vst [vmem:[%s342 + $0x50] sm:$0xff] %v848
        %1626 = vst [vmem:[%s342 + $0x58] sm:$0xff] %v852
        %1627 = vst [vmem:[%s342 + $0x60] sm:$0xff] %v858
        %1628 = vst [vmem:[%s342 + $0x68] sm:$0xff] %v862
        %1629 = vst [vmem:[%s342 + $0x70] sm:$0xff] %v868
        %1630 = vst [vmem:[%s342 + $0x78] sm:$0xff] %v872
        %s1631 = sand.u32 %s132, 1
        %s1632 = scalar_lea.sflag [#allocation4], %s1631
        %s1633 = sand.u32 %s132, 1
        %s1634 = smul.addr %s1633, 256
        %s1635 = scalar_lea.vmem [#allocation8], %s1634
        %s1636 = sand.u32 %s30, 1
        %s1637 = scalar_lea.sflag [#allocation10], %s1636
        %s1638 = sand.u32 %s158, 1
        %s1639 = smul.addr %s1638, 128
        %s1640 = scalar_lea.vmem [#allocation9], %s1639
        %s1641 = sand.u32 %s30, 1
        %s1642 = scalar_lea.sflag [#allocation10], %s1641
        %s1643 = sand.u32 %s184, 1
        %s1644 = smul.addr %s1643, 128
        %s1645 = scalar_lea.vmem [#allocation11], %s1644
        // Predicated region
        $region49: #{tpu_custom_call.1} parent=35 // pred_check
          %p1646 = pneg %p142
        $region50: #{tpu_custom_call.1} parent=35 // pred_check_branch
          %1648 = sbr.rel (%p1646) target = $region52
        $region51: #{tpu_custom_call.1} parent=35 // pred_region
          %s1649 = smul.u32 16, %s30
          %s1651 = ssub.s32 4096, 4096
          %1652 = vsyncadd %s1632, %s1651
          %s1653 = smul.addr %s1649, 2
          %s1654 = smul.addr %s1653, 128
          %s1655 = scalar_lea.hbm %s4, %s1654
          %s1656 = sshll.u32 %s1635, 4
          %s1657 = int_to_ptr.vmem [resolvable:$true] %s1656
          %1662 = dma.vmem_to_hbm [thread:$0]  %s1657, 4096, %s1655, %s1632, 256, 256, 16
        $region52: #{tpu_custom_call.1} parent=35 // pred_fallthru
          _
        // Predicated region
        $region53: #{tpu_custom_call.1} parent=35 // pred_check
          %p1663 = pneg %p168
        $region54: #{tpu_custom_call.1} parent=35 // pred_check_branch
          %1665 = sbr.rel (%p1663) target = $region56
        $region55: #{tpu_custom_call.1} parent=35 // pred_region
          %s1666 = smul.u32 16, %s30
          %s1668 = ssub.s32 2048, 2048
          %1669 = vsyncadd %s1637, %s1668
          %s1670 = smul.addr %s1666, 128
          %s1671 = scalar_lea.hbm %s5, %s1670
          %s1672 = sshll.u32 %s1640, 4
          %s1673 = int_to_ptr.vmem [resolvable:$true] %s1672
          %1678 = dma.vmem_to_hbm [thread:$0]  %s1673, 2048, %s1671, %s1637, 128, 128, 8
        $region56: #{tpu_custom_call.1} parent=35 // pred_fallthru
          _
        // Predicated region
        $region57: #{tpu_custom_call.1} parent=35 // pred_check
          %p1679 = pneg %p194
        $region58: #{tpu_custom_call.1} parent=35 // pred_check_branch
          %1681 = sbr.rel (%p1679) target = $region60
        $region59: #{tpu_custom_call.1} parent=35 // pred_region
          %s1682 = smul.u32 16, %s30
          %s1684 = ssub.s32 2048, 2048
          %1685 = vsyncadd %s1642, %s1684
          %s1686 = smul.addr %s1682, 128
          %s1687 = scalar_lea.hbm %s6, %s1686
          %s1688 = sshll.u32 %s1645, 4
          %s1689 = int_to_ptr.vmem [resolvable:$true] %s1688
          %1694 = dma.vmem_to_hbm [thread:$0]  %s1689, 2048, %s1687, %s1642, 128, 128, 8
        $region60: #{tpu_custom_call.1} parent=35 // pred_fallthru
          _
      $region36: #{tpu_custom_call.1} parent=5 // pred_fallthru
        _
      %p1695 = scmp.le.s32.totalorder 2, %s25
      // Predicated region
      $region61: #{tpu_custom_call.1} parent=5 // pred_check
        %p1696 = pneg %p1695
      $region62: #{tpu_custom_call.1} parent=5 // pred_check_branch
        %1698 = sbr.rel (%p1696) target = $region64
      $region63: #{tpu_custom_call.1} parent=5 // pred_region
        %s1699 = ssub.s32 %s25, 2
        // Predicated region
        $region65: #{tpu_custom_call.1} parent=63 // pred_check
          %p1700 = pneg %p148
        $region66: #{tpu_custom_call.1} parent=63 // pred_check_branch
          %1702 = sbr.rel (%p1700) target = $region68
        $region67: #{tpu_custom_call.1} parent=63 // pred_region
          %s1703 = sand.u32 %s133, 1
          %s1704 = scalar_lea.sflag [#allocation4], %s1703
          %s1705 = sand.u32 %s133, 1
          %s1706 = smul.addr %s1705, 256
          %s1707 = scalar_lea.vmem [#allocation8], %s1706
          %1708 = dma.done %s1704, 4096
        $region68: #{tpu_custom_call.1} parent=63 // pred_fallthru
          _
        // Predicated region
        $region69: #{tpu_custom_call.1} parent=63 // pred_check
          %p1709 = pneg %p174
        $region70: #{tpu_custom_call.1} parent=63 // pred_check_branch
          %1711 = sbr.rel (%p1709) target = $region72
        $region71: #{tpu_custom_call.1} parent=63 // pred_region
          %s1712 = sand.u32 %s31, 1
          %s1713 = scalar_lea.sflag [#allocation10], %s1712
          %s1714 = sand.u32 %s159, 1
          %s1715 = smul.addr %s1714, 128
          %s1716 = scalar_lea.vmem [#allocation9], %s1715
          %1717 = dma.done %s1713, 2048
        $region72: #{tpu_custom_call.1} parent=63 // pred_fallthru
          _
        // Predicated region
        $region73: #{tpu_custom_call.1} parent=63 // pred_check
          %p1718 = pneg %p200
        $region74: #{tpu_custom_call.1} parent=63 // pred_check_branch
          %1720 = sbr.rel (%p1718) target = $region76
        $region75: #{tpu_custom_call.1} parent=63 // pred_region
          %s1721 = sand.u32 %s31, 1
          %s1722 = scalar_lea.sflag [#allocation10], %s1721
          %s1723 = sand.u32 %s185, 1
          %s1724 = smul.addr %s1723, 128
          %s1725 = scalar_lea.vmem [#allocation11], %s1724
          %1726 = dma.done %s1722, 2048
        $region76: #{tpu_custom_call.1} parent=63 // pred_fallthru
          _
      $region64: #{tpu_custom_call.1} parent=5 // pred_fallthru
        _
    $region6: #{tpu_custom_call.1} parent=1 // loop_footer
      %s29 = sadd.s32 1, %s25
    $region7: #{tpu_custom_call.1} parent=1 // loop_footer_branch
      %24 = sbr.rel target = $region3
    $region8: #{tpu_custom_call.1} parent=1 // loop_exit
      _
    %1727 = vsyncpa [#allocation3], 1
    %s1728 = scalar_lea.sflag [#allocation3], 1
    %1729 = vsyncpa %s1728, 1
    %1730 = vsyncpa [#allocation6], 1
    %s1731 = scalar_lea.sflag [#allocation6], 1
    %1732 = vsyncpa %s1731, 1
    %1733 = vsyncpa [#allocation4], 1
    %s1734 = scalar_lea.sflag [#allocation4], 1
    %1735 = vsyncpa %s1734, 1
    %1736 = vsyncpa [#allocation10], 1
    %s1737 = scalar_lea.sflag [#allocation10], 1
    %1738 = vsyncpa %s1737, 1

</llo_original>
